<compile_context>
chip_gen: v5e
topology: v5e:2x2
jax: 0.10.0
libtpu: 0.0.40
codegen_flags: <defaults>
</compile_context>

<pallas_src>
import math
import jax
import jax.numpy as jnp
from jax.experimental import pallas as pl
from jax.experimental.pallas import tpu as pltpu

EPS = 1e-5  # nn.BatchNorm2d default eps


def conv_block_forward(x_nchw, w_oihw, bias, gamma, beta, padding=1):
    """PyTorch-semantics ConvBlock forward. x: NCHW, w: (Cout, Cin, KH, KW).

    `bias` is accepted for API parity but not added inside the kernel: under
    training-mode BatchNorm the conv bias is removed exactly by the mean
    subtraction, so it has no effect on the output.
    """
    del bias
    N, Cin, H, W = x_nchw.shape
    Cout, _, KH, KW = w_oihw.shape
    Hp, Wp = H + 2 * padding, W + 2 * padding
    K = KH * KW * Cin
    HW = H * W
    Cp = ((Cout + 127) // 128) * 128  # channel lanes padded to a multiple of 128

    # ---------------- layout glue (XLA, cold path) ----------------------------
    x_nhwc = jnp.transpose(x_nchw, (0, 2, 3, 1))
    x_pad = jnp.pad(x_nhwc, ((0, 0), (padding, padding), (padding, padding), (0, 0)))
    # (Cout,Cin,KH,KW) -> (KH,KW,Cin,Cout) -> (K, Cout) -> pad lanes -> bf16 MXU operand.
    w_mat = jnp.transpose(w_oihw, (2, 3, 1, 0)).reshape(K, Cout)
    w_mat = jnp.pad(w_mat, ((0, 0), (0, Cp - Cout))).astype(jnp.bfloat16)

    # ---------------- pass 1: conv + per-image (sum, sumsq) -------------------
    def conv_kernel(x_ref, w_ref, y_ref, sum_ref, sq_ref, patch_ref):
        # Build the im2col patch once into VMEM scratch (contraction dim last),
        # slicing each tap directly from the input ref.
        for ky in range(KH):
            for kx in range(KW):
                tap = ky * KW + kx
                win = x_ref[0, ky:ky + H, kx:kx + W, :]              # (H, W, Cin)
                patch_ref[:, tap * Cin:(tap + 1) * Cin] = win.reshape(HW, Cin)
        patch = patch_ref[...].astype(jnp.bfloat16)                  # (HW, K)

        # Single wide MXU matmul, bf16 operands, f32 accumulation.
        acc = jnp.dot(patch, w_ref[...],
                      preferred_element_type=jnp.float32)            # (HW, Cp)

        # One-pass channel statistics for this image (combined outside).
        sum_ref[...] = jnp.sum(acc, axis=0, keepdims=True)[None]     # (1, 1, Cp)
        sq_ref[...] = jnp.sum(acc * acc, axis=0, keepdims=True)[None]

        # Lane-dense (128-lane) unmasked store of the conv result.
        y_ref[...] = acc

    y2d, sums, sqs = pl.pallas_call(
        conv_kernel,
        out_shape=(jax.ShapeDtypeStruct((N * HW, Cp), jnp.float32),
                   jax.ShapeDtypeStruct((N, 1, Cp), jnp.float32),
                   jax.ShapeDtypeStruct((N, 1, Cp), jnp.float32)),
        grid=(N,),
        in_specs=[pl.BlockSpec((1, Hp, Wp, Cin), lambda n: (n, 0, 0, 0)),
                  pl.BlockSpec((K, Cp), lambda n: (0, 0))],
        out_specs=(pl.BlockSpec((HW, Cp), lambda n: (n, 0)),
                   pl.BlockSpec((1, 1, Cp), lambda n: (n, 0, 0)),
                   pl.BlockSpec((1, 1, Cp), lambda n: (n, 0, 0))),
        scratch_shapes=[pltpu.VMEM((HW, K), jnp.float32)],
        compiler_params=pltpu.CompilerParams(dimension_semantics=("parallel",)),
    )(x_pad, w_mat)

    # -------- tiny glue: combine partial stats -> fused scale / shift ---------
    cnt = jnp.float32(N * H * W)
    mean = jnp.sum(sums[:, 0, :Cout], axis=0) / cnt
    var = jnp.maximum(jnp.sum(sqs[:, 0, :Cout], axis=0) / cnt - mean * mean, 0.0)
    scale = gamma.astype(jnp.float32) * jax.lax.rsqrt(var + EPS)
    shift = beta.astype(jnp.float32) - mean * scale
    scale_row = jnp.pad(scale, (0, Cp - Cout)).reshape(1, Cp)
    shift_row = jnp.pad(shift, (0, Cp - Cout)).reshape(1, Cp)

    # ---------------- pass 2: fused normalize + ReLU (lane-dense) -------------
    def bn_relu_kernel(y_ref, sc_ref, sh_ref, o_ref):
        o_ref[...] = jnp.maximum(
            y_ref[...] * sc_ref[...] + sh_ref[...], 0.0).astype(o_ref.dtype)

    out2d = pl.pallas_call(
        bn_relu_kernel,
        out_shape=jax.ShapeDtypeStruct((N * HW, Cp), x_nchw.dtype),
        grid=(N,),
        in_specs=[pl.BlockSpec((HW, Cp), lambda n: (n, 0)),
                  pl.BlockSpec((1, Cp), lambda n: (0, 0)),
                  pl.BlockSpec((1, Cp), lambda n: (0, 0))],
        out_specs=pl.BlockSpec((HW, Cp), lambda n: (n, 0)),
        compiler_params=pltpu.CompilerParams(dimension_semantics=("parallel",)),
    )(y2d, scale_row, shift_row)

    # ---------------- layout glue (XLA): back to NCHW --------------------------
    out_nhwc = out2d[:, :Cout].reshape(N, H, W, Cout)
    return jnp.transpose(out_nhwc, (0, 3, 1, 2))


def _reference(x_nchw, w_oihw, bias, gamma, beta, padding=1):
    # Pure-JAX reference. Conv operands are bf16-rounded to mirror the kernel's
    # bf16 MXU inputs (accumulation stays f32); BN/ReLU in f32.
    xc = x_nchw.astype(jnp.bfloat16).astype(jnp.float32)
    wc = w_oihw.astype(jnp.bfloat16).astype(jnp.float32)
    y = jax.lax.conv_general_dilated(
        xc, wc, window_strides=(1, 1),
        padding=[(padding, padding), (padding, padding)],
        dimension_numbers=("NCHW", "OIHW", "NCHW"))
    y = y + bias.reshape(1, -1, 1, 1)   # kept: cancels under training-mode BN
    mean = jnp.mean(y, axis=(0, 2, 3), keepdims=True)
    var = jnp.mean((y - mean) ** 2, axis=(0, 2, 3), keepdims=True)
    y = (y - mean) * jax.lax.rsqrt(var + EPS)
    y = y * gamma.reshape(1, -1, 1, 1) + beta.reshape(1, -1, 1, 1)
    return jnp.maximum(y, 0.0)


if __name__ == "__main__":
    # Small shapes consistent with the module: batch=2, Cin=4, Cout=8, 16x16.
    N, Cin, Cout, H, W = 2, 4, 8, 16, 16
    KH = KW = 3

    key = jax.random.PRNGKey(0)
    kx_, kw_, kb_ = jax.random.split(key, 3)

    x = jax.random.normal(kx_, (N, Cin, H, W), dtype=jnp.float32)

    fan_in = Cin * KH * KW
    bound = 1.0 / math.sqrt(fan_in)
    w = jax.random.uniform(kw_, (Cout, Cin, KH, KW), jnp.float32, -bound, bound)
    b = jax.random.uniform(kb_, (Cout,), jnp.float32, -bound, bound)
    gamma = jnp.ones((Cout,), jnp.float32)   # BatchNorm2d weight init
    beta = jnp.zeros((Cout,), jnp.float32)   # BatchNorm2d bias init

    out = conv_block_forward(x, w, b, gamma, beta, padding=1)
    out = jax.block_until_ready(out)

    ref = _reference(x, w, b, gamma, beta, padding=1)
    assert out.shape == (N, Cout, H, W)
    # Tolerance accounts for bf16 MXU operands (accumulation/BN stats in f32).
    assert jnp.allclose(out, ref, atol=2e-3, rtol=2e-3), "mismatch vs reference"

    print("KERNEL_OK")
</pallas_src>

<mosaic_0001>
module attributes {stable_mosaic.version = 11 : i64} {
  func.func @conv_kernel(%arg0: i32, %arg1: memref<1x18x18x4xf32, #tpu.memory_space<vmem>>, %arg2: memref<36x128xbf16, #tpu.memory_space<vmem>>, %arg3: memref<256x128xf32, #tpu.memory_space<vmem>>, %arg4: memref<1x1x128xf32, #tpu.memory_space<vmem>>, %arg5: memref<1x1x128xf32, #tpu.memory_space<vmem>>, %arg6: memref<256x36xf32, #tpu.memory_space<vmem>>) attributes {dimension_semantics = [#tpu.dimension_semantics<parallel>], iteration_bounds = array<i64: 2>, scalar_prefetch = 0 : i64, scratch_operands = 1 : i64, tpu.core_type = #tpu.core_type<tc>, window_params = [{transform_indices = @transform_0, window_bounds = array<i64: 1, 18, 18, 4>}, {pipeline_mode = #tpu.pipeline_mode<synchronous>, transform_indices = @transform_1, window_bounds = array<i64: 36, 128>}, {transform_indices = @transform_2, window_bounds = array<i64: 256, 128>}, {transform_indices = @transform_3, window_bounds = array<i64: 1, 1, 128>}, {transform_indices = @transform_4, window_bounds = array<i64: 1, 1, 128>}]} {
    %c0 = arith.constant 0 : index
    %c0_0 = arith.constant 0 : index
    %c0_1 = arith.constant 0 : index
    %c0_2 = arith.constant 0 : index
    %0 = vector.load %arg1[%c0, %c0_0, %c0_1, %c0_2] : memref<1x18x18x4xf32, #tpu.memory_space<vmem>>, vector<1x16x16x4xf32>
    %1 = vector.shape_cast %0 : vector<1x16x16x4xf32> to vector<16x16x4xf32>
    %2 = vector.shape_cast %1 : vector<16x16x4xf32> to vector<256x4xf32>
    %c0_3 = arith.constant 0 : index
    %c0_4 = arith.constant 0 : index
    %3 = vector.load %arg6[%c0_3, %c0_4] : memref<256x36xf32, #tpu.memory_space<vmem>>, vector<256x4xf32>
    tpu.vector_store %arg6[%c0_3, %c0_4], %2 {strides = array<i32>} : memref<256x36xf32, #tpu.memory_space<vmem>>, vector<256x4xf32>,
    %c0_5 = arith.constant 0 : index
    %c0_6 = arith.constant 0 : index
    %c1 = arith.constant 1 : index
    %c0_7 = arith.constant 0 : index
    %4 = vector.load %arg1[%c0_5, %c0_6, %c1, %c0_7] : memref<1x18x18x4xf32, #tpu.memory_space<vmem>>, vector<1x16x16x4xf32>
    %5 = vector.shape_cast %4 : vector<1x16x16x4xf32> to vector<16x16x4xf32>
    %6 = vector.shape_cast %5 : vector<16x16x4xf32> to vector<256x4xf32>
    %c0_8 = arith.constant 0 : index
    %c4 = arith.constant 4 : index
    %7 = vector.load %arg6[%c0_8, %c4] : memref<256x36xf32, #tpu.memory_space<vmem>>, vector<256x4xf32>
    tpu.vector_store %arg6[%c0_8, %c4], %6 {strides = array<i32>} : memref<256x36xf32, #tpu.memory_space<vmem>>, vector<256x4xf32>,
    %c0_9 = arith.constant 0 : index
    %c0_10 = arith.constant 0 : index
    %c2 = arith.constant 2 : index
    %c0_11 = arith.constant 0 : index
    %8 = vector.load %arg1[%c0_9, %c0_10, %c2, %c0_11] : memref<1x18x18x4xf32, #tpu.memory_space<vmem>>, vector<1x16x16x4xf32>
    %9 = vector.shape_cast %8 : vector<1x16x16x4xf32> to vector<16x16x4xf32>
    %10 = vector.shape_cast %9 : vector<16x16x4xf32> to vector<256x4xf32>
    %c0_12 = arith.constant 0 : index
    %c8 = arith.constant 8 : index
    %11 = vector.load %arg6[%c0_12, %c8] : memref<256x36xf32, #tpu.memory_space<vmem>>, vector<256x4xf32>
    tpu.vector_store %arg6[%c0_12, %c8], %10 {strides = array<i32>} : memref<256x36xf32, #tpu.memory_space<vmem>>, vector<256x4xf32>,
    %c0_13 = arith.constant 0 : index
    %c1_14 = arith.constant 1 : index
    %c0_15 = arith.constant 0 : index
    %c0_16 = arith.constant 0 : index
    %12 = vector.load %arg1[%c0_13, %c1_14, %c0_15, %c0_16] : memref<1x18x18x4xf32, #tpu.memory_space<vmem>>, vector<1x16x16x4xf32>
    %13 = vector.shape_cast %12 : vector<1x16x16x4xf32> to vector<16x16x4xf32>
    %14 = vector.shape_cast %13 : vector<16x16x4xf32> to vector<256x4xf32>
    %c0_17 = arith.constant 0 : index
    %c12 = arith.constant 12 : index
    %15 = vector.load %arg6[%c0_17, %c12] : memref<256x36xf32, #tpu.memory_space<vmem>>, vector<256x4xf32>
    tpu.vector_store %arg6[%c0_17, %c12], %14 {strides = array<i32>} : memref<256x36xf32, #tpu.memory_space<vmem>>, vector<256x4xf32>,
    %c0_18 = arith.constant 0 : index
    %c1_19 = arith.constant 1 : index
    %c1_20 = arith.constant 1 : index
    %c0_21 = arith.constant 0 : index
    %16 = vector.load %arg1[%c0_18, %c1_19, %c1_20, %c0_21] : memref<1x18x18x4xf32, #tpu.memory_space<vmem>>, vector<1x16x16x4xf32>
    %17 = vector.shape_cast %16 : vector<1x16x16x4xf32> to vector<16x16x4xf32>
    %18 = vector.shape_cast %17 : vector<16x16x4xf32> to vector<256x4xf32>
    %c0_22 = arith.constant 0 : index
    %c16 = arith.constant 16 : index
    %19 = vector.load %arg6[%c0_22, %c16] : memref<256x36xf32, #tpu.memory_space<vmem>>, vector<256x4xf32>
    tpu.vector_store %arg6[%c0_22, %c16], %18 {strides = array<i32>} : memref<256x36xf32, #tpu.memory_space<vmem>>, vector<256x4xf32>,
    %c0_23 = arith.constant 0 : index
    %c1_24 = arith.constant 1 : index
    %c2_25 = arith.constant 2 : index
    %c0_26 = arith.constant 0 : index
    %20 = vector.load %arg1[%c0_23, %c1_24, %c2_25, %c0_26] : memref<1x18x18x4xf32, #tpu.memory_space<vmem>>, vector<1x16x16x4xf32>
    %21 = vector.shape_cast %20 : vector<1x16x16x4xf32> to vector<16x16x4xf32>
    %22 = vector.shape_cast %21 : vector<16x16x4xf32> to vector<256x4xf32>
    %c0_27 = arith.constant 0 : index
    %c20 = arith.constant 20 : index
    %23 = vector.load %arg6[%c0_27, %c20] : memref<256x36xf32, #tpu.memory_space<vmem>>, vector<256x4xf32>
    tpu.vector_store %arg6[%c0_27, %c20], %22 {strides = array<i32>} : memref<256x36xf32, #tpu.memory_space<vmem>>, vector<256x4xf32>,
    %c0_28 = arith.constant 0 : index
    %c2_29 = arith.constant 2 : index
    %c0_30 = arith.constant 0 : index
    %c0_31 = arith.constant 0 : index
    %24 = vector.load %arg1[%c0_28, %c2_29, %c0_30, %c0_31] : memref<1x18x18x4xf32, #tpu.memory_space<vmem>>, vector<1x16x16x4xf32>
    %25 = vector.shape_cast %24 : vector<1x16x16x4xf32> to vector<16x16x4xf32>
    %26 = vector.shape_cast %25 : vector<16x16x4xf32> to vector<256x4xf32>
    %c0_32 = arith.constant 0 : index
    %c24 = arith.constant 24 : index
    %27 = vector.load %arg6[%c0_32, %c24] : memref<256x36xf32, #tpu.memory_space<vmem>>, vector<256x4xf32>
    tpu.vector_store %arg6[%c0_32, %c24], %26 {strides = array<i32>} : memref<256x36xf32, #tpu.memory_space<vmem>>, vector<256x4xf32>,
    %c0_33 = arith.constant 0 : index
    %c2_34 = arith.constant 2 : index
    %c1_35 = arith.constant 1 : index
    %c0_36 = arith.constant 0 : index
    %28 = vector.load %arg1[%c0_33, %c2_34, %c1_35, %c0_36] : memref<1x18x18x4xf32, #tpu.memory_space<vmem>>, vector<1x16x16x4xf32>
    %29 = vector.shape_cast %28 : vector<1x16x16x4xf32> to vector<16x16x4xf32>
    %30 = vector.shape_cast %29 : vector<16x16x4xf32> to vector<256x4xf32>
    %c0_37 = arith.constant 0 : index
    %c28 = arith.constant 28 : index
    %31 = vector.load %arg6[%c0_37, %c28] : memref<256x36xf32, #tpu.memory_space<vmem>>, vector<256x4xf32>
    tpu.vector_store %arg6[%c0_37, %c28], %30 {strides = array<i32>} : memref<256x36xf32, #tpu.memory_space<vmem>>, vector<256x4xf32>,
    %c0_38 = arith.constant 0 : index
    %c2_39 = arith.constant 2 : index
    %c2_40 = arith.constant 2 : index
    %c0_41 = arith.constant 0 : index
    %32 = vector.load %arg1[%c0_38, %c2_39, %c2_40, %c0_41] : memref<1x18x18x4xf32, #tpu.memory_space<vmem>>, vector<1x16x16x4xf32>
    %33 = vector.shape_cast %32 : vector<1x16x16x4xf32> to vector<16x16x4xf32>
    %34 = vector.shape_cast %33 : vector<16x16x4xf32> to vector<256x4xf32>
    %c0_42 = arith.constant 0 : index
    %c32 = arith.constant 32 : index
    %35 = vector.load %arg6[%c0_42, %c32] : memref<256x36xf32, #tpu.memory_space<vmem>>, vector<256x4xf32>
    tpu.vector_store %arg6[%c0_42, %c32], %34 {strides = array<i32>} : memref<256x36xf32, #tpu.memory_space<vmem>>, vector<256x4xf32>,
    %c0_43 = arith.constant 0 : index
    %c0_44 = arith.constant 0 : index
    %36 = vector.load %arg6[%c0_43, %c0_44] : memref<256x36xf32, #tpu.memory_space<vmem>>, vector<256x36xf32>
    %37 = arith.truncf %36 : vector<256x36xf32> to vector<256x36xbf16>
    %c0_45 = arith.constant 0 : index
    %c0_46 = arith.constant 0 : index
    %38 = vector.load %arg2[%c0_45, %c0_46] : memref<36x128xbf16, #tpu.memory_space<vmem>>, vector<36x128xbf16>
    %cst = arith.constant dense<0.000000e+00> : vector<256x128xf32>
    %39 = tpu.matmul %37, %38, %cst {dimension_numbers = #tpu.dot_dimension_numbers<[1], [0], [0], [1], [0, 0, 1, 1], [], []>} : vector<256x36xbf16>, vector<36x128xbf16>, vector<256x128xf32> -> vector<256x128xf32>
    %cst_47 = arith.constant dense<0.000000e+00> : vector<128xf32>
    %40 = vector.multi_reduction <add>, %39, %cst_47 [0] : vector<256x128xf32> to vector<128xf32>
    %41 = vector.shape_cast %40 : vector<128xf32> to vector<1x128xf32>
    %42 = vector.shape_cast %41 : vector<1x128xf32> to vector<1x1x128xf32>
    %c0_48 = arith.constant 0 : index
    %c0_49 = arith.constant 0 : index
    %c0_50 = arith.constant 0 : index
    %43 = vector.load %arg4[%c0_48, %c0_49, %c0_50] : memref<1x1x128xf32, #tpu.memory_space<vmem>>, vector<1x1x128xf32>
    tpu.vector_store %arg4[%c0_48, %c0_49, %c0_50], %42 {strides = array<i32>} : memref<1x1x128xf32, #tpu.memory_space<vmem>>, vector<1x1x128xf32>,
    %44 = arith.mulf %39, %39 : vector<256x128xf32>
    %cst_51 = arith.constant dense<0.000000e+00> : vector<128xf32>
    %45 = vector.multi_reduction <add>, %44, %cst_51 [0] : vector<256x128xf32> to vector<128xf32>
    %46 = vector.shape_cast %45 : vector<128xf32> to vector<1x128xf32>
    %47 = vector.shape_cast %46 : vector<1x128xf32> to vector<1x1x128xf32>
    %c0_52 = arith.constant 0 : index
    %c0_53 = arith.constant 0 : index
    %c0_54 = arith.constant 0 : index
    %48 = vector.load %arg5[%c0_52, %c0_53, %c0_54] : memref<1x1x128xf32, #tpu.memory_space<vmem>>, vector<1x1x128xf32>
    tpu.vector_store %arg5[%c0_52, %c0_53, %c0_54], %47 {strides = array<i32>} : memref<1x1x128xf32, #tpu.memory_space<vmem>>, vector<1x1x128xf32>,
    %c0_55 = arith.constant 0 : index
    %c0_56 = arith.constant 0 : index
    %49 = vector.load %arg3[%c0_55, %c0_56] : memref<256x128xf32, #tpu.memory_space<vmem>>, vector<256x128xf32>
    tpu.vector_store %arg3[%c0_55, %c0_56], %39 {strides = array<i32>} : memref<256x128xf32, #tpu.memory_space<vmem>>, vector<256x128xf32>,
    return
  }
  func.func @transform_0(%arg0: i32) -> (i32, i32, i32, i32) {
    %c0_i32 = arith.constant 0 : i32
    %c0_i32_0 = arith.constant 0 : i32
    %c0_i32_1 = arith.constant 0 : i32
    %c0_i32_2 = arith.constant 0 : i32
    return %arg0, %c0_i32, %c0_i32_0, %c0_i32_1 : i32, i32, i32, i32
  }
  func.func @transform_1(%arg0: i32) -> (i32, i32) {
    %c0_i32 = arith.constant 0 : i32
    %c0_i32_0 = arith.constant 0 : i32
    %c0_i32_1 = arith.constant 0 : i32
    return %c0_i32, %c0_i32_0 : i32, i32
  }
  func.func @transform_2(%arg0: i32) -> (i32, i32) {
    %c0_i32 = arith.constant 0 : i32
    %c0_i32_0 = arith.constant 0 : i32
    return %arg0, %c0_i32 : i32, i32
  }
  func.func @transform_3(%arg0: i32) -> (i32, i32, i32) {
    %c0_i32 = arith.constant 0 : i32
    %c0_i32_0 = arith.constant 0 : i32
    %c0_i32_1 = arith.constant 0 : i32
    return %arg0, %c0_i32, %c0_i32_0 : i32, i32, i32
  }
  func.func @transform_4(%arg0: i32) -> (i32, i32, i32) {
    %c0_i32 = arith.constant 0 : i32
    %c0_i32_0 = arith.constant 0 : i32
    %c0_i32_1 = arith.constant 0 : i32
    return %arg0, %c0_i32, %c0_i32_0 : i32, i32, i32
  }
}

</mosaic_0001>

<llo_original>
// kernel: tpu_custom_call.1
$region0: #{tpu_custom_call.1}
  #allocation0 [shape = 'u32[]', space=smem, size = 0x4, offset = 0x4, fixed_abs, tag = 'smem constant byte address 0x4 - core index']
  #allocation1 [shape = 'u32[72,128]{1,0:T(1,128)}', space=vmem, size = 0x9000, scoped, tag = 'internal scratch']
  #allocation2 [shape = 'f32[256,36]{1,0:T(8,128)}', space=vmem, size = 0x20000, scoped, tag = 'scratch operand']
  %s0 = inlined_call_operand.vmem [shape: f32[2,18,18,4], index: 0, kind: input, shape index: {}]
  %s1 = inlined_call_operand.vmem [shape: bf16[36,128], index: 1, kind: input, shape index: {}]
  %s2 = inlined_call_operand.hbm [shape: f32[512,128], index: 2, kind: output, shape index: {0}]
  %s3 = inlined_call_operand.hbm [shape: f32[2,1,128], index: 3, kind: output, shape index: {1}]
  %s4 = inlined_call_operand.hbm [shape: f32[2,1,128], index: 4, kind: output, shape index: {2}]
  %5 = xla_tuple %s2, %s3, %s4
  %s6 = sld [smem:[#allocation0]]
  $region57: #{tpu_custom_call.1} parent=0
    _
  %s8 = ssub.s32 1, %s6
  %s9 = scalar_select 0, %s8, %s6
  $region1: #{tpu_custom_call.1} parent=0
    #allocation3 [shape = 'u8[262144]{0}', space=vmem, size = 0x40000, scoped, tag = 'output window, operand 0']
    #allocation4 [shape = 's32[2]{0}', space=sflag, size = 0x8, scoped, tag = 'scoped memory for tpu_custom_call.1']
    #allocation5 [shape = 'u8[1024]{0}', space=vmem, size = 0x400, scoped, tag = 'output window, operand 1']
    #allocation6 [shape = 's32[2]{0}', space=sflag, size = 0x8, scoped, tag = 'scoped memory for tpu_custom_call.1']
    #allocation7 [shape = 'u8[1024]{0}', space=vmem, size = 0x400, scoped, tag = 'output window, operand 2']
    %10 = vsyncpa [#allocation4], 0
    %s11 = scalar_lea.sflag [#allocation4], 1
    %12 = vsyncpa %s11, 0
    %13 = vsyncpa [#allocation6], 0
    %s14 = scalar_lea.sflag [#allocation6], 1
    %15 = vsyncpa %s14, 0
    loop: start=0, step=1, limit=4
    $region2: #{tpu_custom_call.1} parent=1 // loop_pre_header
      _
    $region3: #{tpu_custom_call.1} parent=1 // loop_header
      %s17 = sphi 0, %s21
      %p18 = scmp.ge.s32.totalorder %s17, 4
      %s27 = sphi 0, %s29
      %s30 = sphi 0, %s27
      %s31 = sphi 0, %s30
      %s47 = sphi 0, %s31
      %s51 = sphi 0, %s51
      %s53 = sphi 0, %s51
      %s54 = sphi 0, %s53
      %s68 = sphi 0, %s54
      %s74 = sphi 0, %s76
      %s77 = sphi 0, %s74
      %s78 = sphi 0, %s77
      %s94 = sphi 0, %s78
      %s100 = sphi 0, %s102
      %s103 = sphi 0, %s100
      %s104 = sphi 0, %s103
      %s120 = sphi 0, %s104
      %s126 = sphi 0, %s128
      %s129 = sphi 0, %s126
      %s130 = sphi 0, %s129
      %s146 = sphi 0, %s130
    $region4: #{tpu_custom_call.1} parent=1 // loop_header_branch
      %20 = sbr.rel (%p18) target = $region8
    $region5: #{tpu_custom_call.1} parent=1 // loop_body
      %s22 = ssub.s32 %s17, 1
      %s23 = ssub.s32 %s17, 2
      %s24 = sadd.s32 %s17, 1
      %s25 = ssub.s32 %s17, %s24
      %p26 = scmp.eq.s32.totalorder %s25, 0
      %s28 = sadd.s32 %s27, 1
      %s29 = scalar_select %p26, %s27, %s28
      %p32 = pneg %p26
      %p33 = scmp.eq.s32.totalorder %s17, 1
      %p34 = por %p32, %p33
      %p35 = scmp.ne.s32.totalorder %s27, %s30
      %p36 = scmp.eq.s32.totalorder %s17, 0
      %p37 = por %p35, %p36
      %p38 = scmp.ne.s32.totalorder %s27, %s30
      %p39 = scmp.eq.s32.totalorder %s22, 1
      %p40 = por %p38, %p39
      %p41 = scmp.ne.s32.totalorder %s30, %s31
      %p42 = scmp.eq.s32.totalorder %s22, 0
      %p43 = por %p41, %p42
      %p44 = scmp.ne.s32.totalorder %s30, %s31
      %p45 = scmp.eq.s32.totalorder %s23, 1
      %p46 = por %p44, %p45
      %p48 = scmp.ne.s32.totalorder %s31, %s47
      %p49 = scmp.eq.s32.totalorder %s23, 0
      %p50 = por %p48, %p49
      %s52 = sadd.s32 %s51, 1
      %p55 = scmp.eq.s32.totalorder %s17, 1
      %p56 = scmp.ne.s32.totalorder %s51, %s53
      %p57 = scmp.eq.s32.totalorder %s17, 0
      %p58 = por %p56, %p57
      %p59 = scmp.ne.s32.totalorder %s51, %s53
      %p60 = scmp.eq.s32.totalorder %s22, 1
      %p61 = por %p59, %p60
      %p62 = scmp.ne.s32.totalorder %s53, %s54
      %p63 = scmp.eq.s32.totalorder %s22, 0
      %p64 = por %p62, %p63
      %p65 = scmp.ne.s32.totalorder %s53, %s54
      %p66 = scmp.eq.s32.totalorder %s23, 1
      %p67 = por %p65, %p66
      %p69 = scmp.ne.s32.totalorder %s54, %s68
      %p70 = scmp.eq.s32.totalorder %s23, 0
      %p71 = por %p69, %p70
      %s72 = ssub.s32 %s17, %s24
      %p73 = scmp.eq.s32.totalorder %s72, 0
      %s75 = sadd.s32 %s74, 1
      %s76 = scalar_select %p73, %s74, %s75
      %p79 = pneg %p73
      %p80 = scmp.eq.s32.totalorder %s17, 1
      %p81 = por %p79, %p80
      %p82 = scmp.ne.s32.totalorder %s74, %s77
      %p83 = scmp.eq.s32.totalorder %s17, 0
      %p84 = por %p82, %p83
      %p85 = scmp.ne.s32.totalorder %s74, %s77
      %p86 = scmp.eq.s32.totalorder %s22, 1
      %p87 = por %p85, %p86
      %p88 = scmp.ne.s32.totalorder %s77, %s78
      %p89 = scmp.eq.s32.totalorder %s22, 0
      %p90 = por %p88, %p89
      %p91 = scmp.ne.s32.totalorder %s77, %s78
      %p92 = scmp.eq.s32.totalorder %s23, 1
      %p93 = por %p91, %p92
      %p95 = scmp.ne.s32.totalorder %s78, %s94
      %p96 = scmp.eq.s32.totalorder %s23, 0
      %p97 = por %p95, %p96
      %s98 = ssub.s32 %s17, %s24
      %p99 = scmp.eq.s32.totalorder %s98, 0
      %s101 = sadd.s32 %s100, 1
      %s102 = scalar_select %p99, %s100, %s101
      %p105 = pneg %p99
      %p106 = scmp.eq.s32.totalorder %s17, 1
      %p107 = por %p105, %p106
      %p108 = scmp.ne.s32.totalorder %s100, %s103
      %p109 = scmp.eq.s32.totalorder %s17, 0
      %p110 = por %p108, %p109
      %p111 = scmp.ne.s32.totalorder %s100, %s103
      %p112 = scmp.eq.s32.totalorder %s22, 1
      %p113 = por %p111, %p112
      %p114 = scmp.ne.s32.totalorder %s103, %s104
      %p115 = scmp.eq.s32.totalorder %s22, 0
      %p116 = por %p114, %p115
      %p117 = scmp.ne.s32.totalorder %s103, %s104
      %p118 = scmp.eq.s32.totalorder %s23, 1
      %p119 = por %p117, %p118
      %p121 = scmp.ne.s32.totalorder %s104, %s120
      %p122 = scmp.eq.s32.totalorder %s23, 0
      %p123 = por %p121, %p122
      %s124 = ssub.s32 %s17, %s24
      %p125 = scmp.eq.s32.totalorder %s124, 0
      %s127 = sadd.s32 %s126, 1
      %s128 = scalar_select %p125, %s126, %s127
      %p131 = pneg %p125
      %p132 = scmp.eq.s32.totalorder %s17, 1
      %p133 = por %p131, %p132
      %p134 = scmp.ne.s32.totalorder %s126, %s129
      %p135 = scmp.eq.s32.totalorder %s17, 0
      %p136 = por %p134, %p135
      %p137 = scmp.ne.s32.totalorder %s126, %s129
      %p138 = scmp.eq.s32.totalorder %s22, 1
      %p139 = por %p137, %p138
      %p140 = scmp.ne.s32.totalorder %s129, %s130
      %p141 = scmp.eq.s32.totalorder %s22, 0
      %p142 = por %p140, %p141
      %p143 = scmp.ne.s32.totalorder %s129, %s130
      %p144 = scmp.eq.s32.totalorder %s23, 1
      %p145 = por %p143, %p144
      %p147 = scmp.ne.s32.totalorder %s130, %s146
      %p148 = scmp.eq.s32.totalorder %s23, 0
      %p149 = por %p147, %p148
      %p150 = scmp.le.s32.totalorder 1, %s17
      %p151 = scmp.lt.s32.totalorder %s17, 3
      %p152 = pnand %p150, %p151
      %p153 = pneg %p152
      // Predicated region
      $region9: #{tpu_custom_call.1} parent=5 // pred_check
        _
      $region10: #{tpu_custom_call.1} parent=5 // pred_check_branch
        %155 = sbr.rel (%p152) target = $region12
      $region11: #{tpu_custom_call.1} parent=5 // pred_region
        %s156 = ssub.s32 %s17, 1
        // Predicated region
        $region13: #{tpu_custom_call.1} parent=11 // pred_check
          %p157 = pneg %p64
        $region14: #{tpu_custom_call.1} parent=11 // pred_check_branch
          %159 = sbr.rel (%p157) target = $region16
        $region15: #{tpu_custom_call.1} parent=11 // pred_region
          _
        $region16: #{tpu_custom_call.1} parent=11 // pred_fallthru
          _
      $region12: #{tpu_custom_call.1} parent=5 // pred_fallthru
        _
      %p160 = scmp.lt.s32.totalorder %s17, 2
      // Predicated region
      $region17: #{tpu_custom_call.1} parent=5 // pred_check
        %p161 = pneg %p160
      $region18: #{tpu_custom_call.1} parent=5 // pred_check_branch
        %163 = sbr.rel (%p161) target = $region20
      $region19: #{tpu_custom_call.1} parent=5 // pred_region
        // Predicated region
        $region21: #{tpu_custom_call.1} parent=19 // pred_check
          %p164 = pneg %p37
        $region22: #{tpu_custom_call.1} parent=19 // pred_check_branch
          %166 = sbr.rel (%p164) target = $region24
        $region23: #{tpu_custom_call.1} parent=19 // pred_region
          %p167 = scmp.lt.s32.totalorder %s17, 1
          %s168 = scalar_select %p167, %s17, 1
          %s169 = smul.addr %s168, 54
          %s170 = smul.addr %s169, 8
          %s171 = scalar_lea.vmem %s0, %s170
        $region24: #{tpu_custom_call.1} parent=19 // pred_fallthru
          _
      $region20: #{tpu_custom_call.1} parent=5 // pred_fallthru
        _
      %p172 = scmp.le.s32.totalorder 1, %s17
      %p173 = scmp.lt.s32.totalorder %s17, 3
      %p174 = pnand %p172, %p173
      %p175 = pneg %p174
      // Predicated region
      $region25: #{tpu_custom_call.1} parent=5 // pred_check
        _
      $region26: #{tpu_custom_call.1} parent=5 // pred_check_branch
        %177 = sbr.rel (%p174) target = $region28
      $region27: #{tpu_custom_call.1} parent=5 // pred_region
        %s178 = ssub.s32 %s17, 1
        %p179 = scmp.lt.s32.totalorder %s22, 1
        %s180 = scalar_select %p179, %s22, 1
        %s181 = smul.addr %s180, 54
        %s182 = smul.addr %s181, 8
        %s183 = scalar_lea.vmem %s0, %s182
        %p184 = pneg %p43
        %p185 = pneg %p40
        %p186 = pneg %p64
        %p187 = pneg %p61
        %p188 = pneg %p90
        %p189 = pneg %p87
        %s190 = sand.u32 %s77, 1
        %s191 = scalar_lea.sflag [#allocation4], %s190
        %s192 = sand.u32 %s77, 1
        %s193 = smul.addr %s192, 256
        %s194 = scalar_lea.vmem [#allocation3], %s193
        %p195 = pneg %p116
        %p196 = pneg %p113
        %s197 = sand.u32 %s22, 1
        %s198 = scalar_lea.sflag [#allocation6], %s197
        %s199 = sand.u32 %s103, 1
        %s200 = scalar_lea.vmem [#allocation5], %s199
        %p201 = pneg %p142
        %p202 = pneg %p139
        %s203 = sand.u32 %s22, 1
        %s204 = scalar_lea.sflag [#allocation6], %s203
        %s205 = sand.u32 %s129, 1
        %s206 = scalar_lea.vmem [#allocation7], %s205
        %p207 = scmp.lt.s32.totalorder %s22, 1
        %s208 = scalar_select %p207, %s22, 1
        %s209 = smul.addr %s208, 54
        %s210 = smul.addr %s209, 8
        %s211 = scalar_lea.vmem %s0, %s210
        %s212 = smul.u32 32, %s22
        %v214 = vld [vmem:[%s211] sm:$0xff]
        %v215 = vld [vmem:[%s211 + $0x8] sm:$0xff]
        %v216 = vld [vmem:[%s211 + $0x18] sm:$0xff]
        %v217 = vld [vmem:[%s211 + $0x20] sm:$0xff]
        %v218 = vld [vmem:[%s211 + $0x30] sm:$0xff]
        %v219 = vld [vmem:[%s211 + $0x38] sm:$0xff]
        %v220 = vld [vmem:[%s211 + $0x48] sm:$0xff]
        %v221 = vld [vmem:[%s211 + $0x50] sm:$0xff]
        %v222 = vld [vmem:[%s211 + $0x60] sm:$0xff]
        %v223 = vld [vmem:[%s211 + $0x68] sm:$0xff]
        %v224 = vld [vmem:[%s211 + $0x78] sm:$0xff]
        %v225 = vld [vmem:[%s211 + $0x80] sm:$0xff]
        %v226 = vld [vmem:[%s211 + $0x90] sm:$0xff]
        %v227 = vld [vmem:[%s211 + $0x98] sm:$0xff]
        %v228 = vld [vmem:[%s211 + $0xa8] sm:$0xff]
        %v229 = vld [vmem:[%s211 + $0xb0] sm:$0xff]
        %v230 = vld [vmem:[%s211 + $0xc0] sm:$0xff]
        %v231 = vld [vmem:[%s211 + $0xc8] sm:$0xff]
        %v232 = vld [vmem:[%s211 + $0xd8] sm:$0xff]
        %v233 = vld [vmem:[%s211 + $0xe0] sm:$0xff]
        %v234 = vld [vmem:[%s211 + $0xf0] sm:$0xff]
        %v235 = vld [vmem:[%s211 + $0xf8] sm:$0xff]
        %v236 = vld [vmem:[%s211 + $0x108] sm:$0xff]
        %v237 = vld [vmem:[%s211 + $0x110] sm:$0xff]
        %v238 = vld [vmem:[%s211 + $0x120] sm:$0xff]
        %v239 = vld [vmem:[%s211 + $0x128] sm:$0xff]
        %v240 = vld [vmem:[%s211 + $0x138] sm:$0xff]
        %v241 = vld [vmem:[%s211 + $0x140] sm:$0xff]
        %v242 = vld [vmem:[%s211 + $0x150] sm:$0xff]
        %v243 = vld [vmem:[%s211 + $0x158] sm:$0xff]
        %v244 = vld [vmem:[%s211 + $0x168] sm:$0xff]
        %v245 = vld [vmem:[%s211 + $0x170] sm:$0xff]
        %vm246 = vcmask 31744
        %247 = vst.msk [vmem:[#allocation2] sm:$0xff] %vm246, %v214
        %248 = vst.msk [vmem:[#allocation2 + $0x8] sm:$0xff] %vm246, %v215
        %249 = vst.msk [vmem:[#allocation2 + $0x10] sm:$0xff] %vm246, %v216
        %250 = vst.msk [vmem:[#allocation2 + $0x18] sm:$0xff] %vm246, %v217
        %251 = vst.msk [vmem:[#allocation2 + $0x20] sm:$0xff] %vm246, %v218
        %252 = vst.msk [vmem:[#allocation2 + $0x28] sm:$0xff] %vm246, %v219
        %253 = vst.msk [vmem:[#allocation2 + $0x30] sm:$0xff] %vm246, %v220
        %254 = vst.msk [vmem:[#allocation2 + $0x38] sm:$0xff] %vm246, %v221
        %255 = vst.msk [vmem:[#allocation2 + $0x40] sm:$0xff] %vm246, %v222
        %256 = vst.msk [vmem:[#allocation2 + $0x48] sm:$0xff] %vm246, %v223
        %257 = vst.msk [vmem:[#allocation2 + $0x50] sm:$0xff] %vm246, %v224
        %258 = vst.msk [vmem:[#allocation2 + $0x58] sm:$0xff] %vm246, %v225
        %259 = vst.msk [vmem:[#allocation2 + $0x60] sm:$0xff] %vm246, %v226
        %260 = vst.msk [vmem:[#allocation2 + $0x68] sm:$0xff] %vm246, %v227
        %261 = vst.msk [vmem:[#allocation2 + $0x70] sm:$0xff] %vm246, %v228
        %262 = vst.msk [vmem:[#allocation2 + $0x78] sm:$0xff] %vm246, %v229
        %263 = vst.msk [vmem:[#allocation2 + $0x80] sm:$0xff] %vm246, %v230
        %264 = vst.msk [vmem:[#allocation2 + $0x88] sm:$0xff] %vm246, %v231
        %265 = vst.msk [vmem:[#allocation2 + $0x90] sm:$0xff] %vm246, %v232
        %266 = vst.msk [vmem:[#allocation2 + $0x98] sm:$0xff] %vm246, %v233
        %267 = vst.msk [vmem:[#allocation2 + $0xa0] sm:$0xff] %vm246, %v234
        %268 = vst.msk [vmem:[#allocation2 + $0xa8] sm:$0xff] %vm246, %v235
        %269 = vst.msk [vmem:[#allocation2 + $0xb0] sm:$0xff] %vm246, %v236
        %270 = vst.msk [vmem:[#allocation2 + $0xb8] sm:$0xff] %vm246, %v237
        %271 = vst.msk [vmem:[#allocation2 + $0xc0] sm:$0xff] %vm246, %v238
        %272 = vst.msk [vmem:[#allocation2 + $0xc8] sm:$0xff] %vm246, %v239
        %273 = vst.msk [vmem:[#allocation2 + $0xd0] sm:$0xff] %vm246, %v240
        %274 = vst.msk [vmem:[#allocation2 + $0xd8] sm:$0xff] %vm246, %v241
        %275 = vst.msk [vmem:[#allocation2 + $0xe0] sm:$0xff] %vm246, %v242
        %276 = vst.msk [vmem:[#allocation2 + $0xe8] sm:$0xff] %vm246, %v243
        %277 = vst.msk [vmem:[#allocation2 + $0xf0] sm:$0xff] %vm246, %v244
        %278 = vst.msk [vmem:[#allocation2 + $0xf8] sm:$0xff] %vm246, %v245
        %v279 = vld [vmem:[%s211 + $0x1] sm:$0xff]
        %v280 = vld [vmem:[%s211 + $0x9] sm:$0xff]
        %v281 = vld [vmem:[%s211 + $0x19] sm:$0xff]
        %v282 = vld [vmem:[%s211 + $0x21] sm:$0xff]
        %v283 = vld [vmem:[%s211 + $0x31] sm:$0xff]
        %v284 = vld [vmem:[%s211 + $0x39] sm:$0xff]
        %v285 = vld [vmem:[%s211 + $0x49] sm:$0xff]
        %v286 = vld [vmem:[%s211 + $0x51] sm:$0xff]
        %v287 = vld [vmem:[%s211 + $0x61] sm:$0xff]
        %v288 = vld [vmem:[%s211 + $0x69] sm:$0xff]
        %v289 = vld [vmem:[%s211 + $0x79] sm:$0xff]
        %v290 = vld [vmem:[%s211 + $0x81] sm:$0xff]
        %v291 = vld [vmem:[%s211 + $0x91] sm:$0xff]
        %v292 = vld [vmem:[%s211 + $0x99] sm:$0xff]
        %v293 = vld [vmem:[%s211 + $0xa9] sm:$0xff]
        %v294 = vld [vmem:[%s211 + $0xb1] sm:$0xff]
        %v295 = vld [vmem:[%s211 + $0xc1] sm:$0xff]
        %v296 = vld [vmem:[%s211 + $0xc9] sm:$0xff]
        %v297 = vld [vmem:[%s211 + $0xd9] sm:$0xff]
        %v298 = vld [vmem:[%s211 + $0xe1] sm:$0xff]
        %v299 = vld [vmem:[%s211 + $0xf1] sm:$0xff]
        %v300 = vld [vmem:[%s211 + $0xf9] sm:$0xff]
        %v301 = vld [vmem:[%s211 + $0x109] sm:$0xff]
        %v302 = vld [vmem:[%s211 + $0x111] sm:$0xff]
        %v303 = vld [vmem:[%s211 + $0x121] sm:$0xff]
        %v304 = vld [vmem:[%s211 + $0x129] sm:$0xff]
        %v305 = vld [vmem:[%s211 + $0x139] sm:$0xff]
        %v306 = vld [vmem:[%s211 + $0x141] sm:$0xff]
        %v307 = vld [vmem:[%s211 + $0x151] sm:$0xff]
        %v308 = vld [vmem:[%s211 + $0x159] sm:$0xff]
        %v309 = vld [vmem:[%s211 + $0x169] sm:$0xff]
        %v310 = vld [vmem:[%s211 + $0x171] sm:$0xff]
        %343 = vrot.lane.b32.xlu0 %v279, 4
        %v344 = vpop.permute.xlu0 %343
        %345 = vrot.lane.b32.xlu0 %v280, 4
        %v346 = vpop.permute.xlu0 %345
        %347 = vrot.lane.b32.xlu0 %v281, 4
        %v348 = vpop.permute.xlu0 %347
        %349 = vrot.lane.b32.xlu0 %v282, 4
        %v350 = vpop.permute.xlu0 %349
        %351 = vrot.lane.b32.xlu0 %v283, 4
        %v352 = vpop.permute.xlu0 %351
        %353 = vrot.lane.b32.xlu0 %v284, 4
        %v354 = vpop.permute.xlu0 %353
        %355 = vrot.lane.b32.xlu0 %v285, 4
        %v356 = vpop.permute.xlu0 %355
        %357 = vrot.lane.b32.xlu0 %v286, 4
        %v358 = vpop.permute.xlu0 %357
        %359 = vrot.lane.b32.xlu0 %v287, 4
        %v360 = vpop.permute.xlu0 %359
        %361 = vrot.lane.b32.xlu0 %v288, 4
        %v362 = vpop.permute.xlu0 %361
        %363 = vrot.lane.b32.xlu0 %v289, 4
        %v364 = vpop.permute.xlu0 %363
        %365 = vrot.lane.b32.xlu0 %v290, 4
        %v366 = vpop.permute.xlu0 %365
        %367 = vrot.lane.b32.xlu0 %v291, 4
        %v368 = vpop.permute.xlu0 %367
        %369 = vrot.lane.b32.xlu0 %v292, 4
        %v370 = vpop.permute.xlu0 %369
        %371 = vrot.lane.b32.xlu0 %v293, 4
        %v372 = vpop.permute.xlu0 %371
        %373 = vrot.lane.b32.xlu0 %v294, 4
        %v374 = vpop.permute.xlu0 %373
        %375 = vrot.lane.b32.xlu0 %v295, 4
        %v376 = vpop.permute.xlu0 %375
        %377 = vrot.lane.b32.xlu0 %v296, 4
        %v378 = vpop.permute.xlu0 %377
        %379 = vrot.lane.b32.xlu0 %v297, 4
        %v380 = vpop.permute.xlu0 %379
        %381 = vrot.lane.b32.xlu0 %v298, 4
        %v382 = vpop.permute.xlu0 %381
        %383 = vrot.lane.b32.xlu0 %v299, 4
        %v384 = vpop.permute.xlu0 %383
        %385 = vrot.lane.b32.xlu0 %v300, 4
        %v386 = vpop.permute.xlu0 %385
        %387 = vrot.lane.b32.xlu0 %v301, 4
        %v388 = vpop.permute.xlu0 %387
        %389 = vrot.lane.b32.xlu0 %v302, 4
        %v390 = vpop.permute.xlu0 %389
        %391 = vrot.lane.b32.xlu0 %v303, 4
        %v392 = vpop.permute.xlu0 %391
        %393 = vrot.lane.b32.xlu0 %v304, 4
        %v394 = vpop.permute.xlu0 %393
        %395 = vrot.lane.b32.xlu0 %v305, 4
        %v396 = vpop.permute.xlu0 %395
        %397 = vrot.lane.b32.xlu0 %v306, 4
        %v398 = vpop.permute.xlu0 %397
        %399 = vrot.lane.b32.xlu0 %v307, 4
        %v400 = vpop.permute.xlu0 %399
        %401 = vrot.lane.b32.xlu0 %v308, 4
        %v402 = vpop.permute.xlu0 %401
        %403 = vrot.lane.b32.xlu0 %v309, 4
        %v404 = vpop.permute.xlu0 %403
        %405 = vrot.lane.b32.xlu0 %v310, 4
        %v406 = vpop.permute.xlu0 %405
        %vm439 = vcmask 64544
        %440 = vst.msk [vmem:[#allocation2] sm:$0xff] %vm439, %v344
        %441 = vst.msk [vmem:[#allocation2 + $0x8] sm:$0xff] %vm439, %v346
        %442 = vst.msk [vmem:[#allocation2 + $0x10] sm:$0xff] %vm439, %v348
        %443 = vst.msk [vmem:[#allocation2 + $0x18] sm:$0xff] %vm439, %v350
        %444 = vst.msk [vmem:[#allocation2 + $0x20] sm:$0xff] %vm439, %v352
        %445 = vst.msk [vmem:[#allocation2 + $0x28] sm:$0xff] %vm439, %v354
        %446 = vst.msk [vmem:[#allocation2 + $0x30] sm:$0xff] %vm439, %v356
        %447 = vst.msk [vmem:[#allocation2 + $0x38] sm:$0xff] %vm439, %v358
        %448 = vst.msk [vmem:[#allocation2 + $0x40] sm:$0xff] %vm439, %v360
        %449 = vst.msk [vmem:[#allocation2 + $0x48] sm:$0xff] %vm439, %v362
        %450 = vst.msk [vmem:[#allocation2 + $0x50] sm:$0xff] %vm439, %v364
        %451 = vst.msk [vmem:[#allocation2 + $0x58] sm:$0xff] %vm439, %v366
        %452 = vst.msk [vmem:[#allocation2 + $0x60] sm:$0xff] %vm439, %v368
        %453 = vst.msk [vmem:[#allocation2 + $0x68] sm:$0xff] %vm439, %v370
        %454 = vst.msk [vmem:[#allocation2 + $0x70] sm:$0xff] %vm439, %v372
        %455 = vst.msk [vmem:[#allocation2 + $0x78] sm:$0xff] %vm439, %v374
        %456 = vst.msk [vmem:[#allocation2 + $0x80] sm:$0xff] %vm439, %v376
        %457 = vst.msk [vmem:[#allocation2 + $0x88] sm:$0xff] %vm439, %v378
        %458 = vst.msk [vmem:[#allocation2 + $0x90] sm:$0xff] %vm439, %v380
        %459 = vst.msk [vmem:[#allocation2 + $0x98] sm:$0xff] %vm439, %v382
        %460 = vst.msk [vmem:[#allocation2 + $0xa0] sm:$0xff] %vm439, %v384
        %461 = vst.msk [vmem:[#allocation2 + $0xa8] sm:$0xff] %vm439, %v386
        %462 = vst.msk [vmem:[#allocation2 + $0xb0] sm:$0xff] %vm439, %v388
        %463 = vst.msk [vmem:[#allocation2 + $0xb8] sm:$0xff] %vm439, %v390
        %464 = vst.msk [vmem:[#allocation2 + $0xc0] sm:$0xff] %vm439, %v392
        %465 = vst.msk [vmem:[#allocation2 + $0xc8] sm:$0xff] %vm439, %v394
        %466 = vst.msk [vmem:[#allocation2 + $0xd0] sm:$0xff] %vm439, %v396
        %467 = vst.msk [vmem:[#allocation2 + $0xd8] sm:$0xff] %vm439, %v398
        %468 = vst.msk [vmem:[#allocation2 + $0xe0] sm:$0xff] %vm439, %v400
        %469 = vst.msk [vmem:[#allocation2 + $0xe8] sm:$0xff] %vm439, %v402
        %470 = vst.msk [vmem:[#allocation2 + $0xf0] sm:$0xff] %vm439, %v404
        %471 = vst.msk [vmem:[#allocation2 + $0xf8] sm:$0xff] %vm439, %v406
        %v472 = vld [vmem:[%s211 + $0x2] sm:$0xff]
        %v473 = vld [vmem:[%s211 + $0xa] sm:$0xff]
        %v474 = vld [vmem:[%s211 + $0x1a] sm:$0xff]
        %v475 = vld [vmem:[%s211 + $0x22] sm:$0xff]
        %v476 = vld [vmem:[%s211 + $0x32] sm:$0xff]
        %v477 = vld [vmem:[%s211 + $0x3a] sm:$0xff]
        %v478 = vld [vmem:[%s211 + $0x4a] sm:$0xff]
        %v479 = vld [vmem:[%s211 + $0x52] sm:$0xff]
        %v480 = vld [vmem:[%s211 + $0x62] sm:$0xff]
        %v481 = vld [vmem:[%s211 + $0x6a] sm:$0xff]
        %v482 = vld [vmem:[%s211 + $0x7a] sm:$0xff]
        %v483 = vld [vmem:[%s211 + $0x82] sm:$0xff]
        %v484 = vld [vmem:[%s211 + $0x92] sm:$0xff]
        %v485 = vld [vmem:[%s211 + $0x9a] sm:$0xff]
        %v486 = vld [vmem:[%s211 + $0xaa] sm:$0xff]
        %v487 = vld [vmem:[%s211 + $0xb2] sm:$0xff]
        %v488 = vld [vmem:[%s211 + $0xc2] sm:$0xff]
        %v489 = vld [vmem:[%s211 + $0xca] sm:$0xff]
        %v490 = vld [vmem:[%s211 + $0xda] sm:$0xff]
        %v491 = vld [vmem:[%s211 + $0xe2] sm:$0xff]
        %v492 = vld [vmem:[%s211 + $0xf2] sm:$0xff]
        %v493 = vld [vmem:[%s211 + $0xfa] sm:$0xff]
        %v494 = vld [vmem:[%s211 + $0x10a] sm:$0xff]
        %v495 = vld [vmem:[%s211 + $0x112] sm:$0xff]
        %v496 = vld [vmem:[%s211 + $0x122] sm:$0xff]
        %v497 = vld [vmem:[%s211 + $0x12a] sm:$0xff]
        %v498 = vld [vmem:[%s211 + $0x13a] sm:$0xff]
        %v499 = vld [vmem:[%s211 + $0x142] sm:$0xff]
        %v500 = vld [vmem:[%s211 + $0x152] sm:$0xff]
        %v501 = vld [vmem:[%s211 + $0x15a] sm:$0xff]
        %v502 = vld [vmem:[%s211 + $0x16a] sm:$0xff]
        %v503 = vld [vmem:[%s211 + $0x172] sm:$0xff]
        %536 = vrot.lane.b32.xlu0 %v472, 8
        %v537 = vpop.permute.xlu0 %536
        %538 = vrot.lane.b32.xlu0 %v473, 8
        %v539 = vpop.permute.xlu0 %538
        %540 = vrot.lane.b32.xlu0 %v474, 8
        %v541 = vpop.permute.xlu0 %540
        %542 = vrot.lane.b32.xlu0 %v475, 8
        %v543 = vpop.permute.xlu0 %542
        %544 = vrot.lane.b32.xlu0 %v476, 8
        %v545 = vpop.permute.xlu0 %544
        %546 = vrot.lane.b32.xlu0 %v477, 8
        %v547 = vpop.permute.xlu0 %546
        %548 = vrot.lane.b32.xlu0 %v478, 8
        %v549 = vpop.permute.xlu0 %548
        %550 = vrot.lane.b32.xlu0 %v479, 8
        %v551 = vpop.permute.xlu0 %550
        %552 = vrot.lane.b32.xlu0 %v480, 8
        %v553 = vpop.permute.xlu0 %552
        %554 = vrot.lane.b32.xlu0 %v481, 8
        %v555 = vpop.permute.xlu0 %554
        %556 = vrot.lane.b32.xlu0 %v482, 8
        %v557 = vpop.permute.xlu0 %556
        %558 = vrot.lane.b32.xlu0 %v483, 8
        %v559 = vpop.permute.xlu0 %558
        %560 = vrot.lane.b32.xlu0 %v484, 8
        %v561 = vpop.permute.xlu0 %560
        %562 = vrot.lane.b32.xlu0 %v485, 8
        %v563 = vpop.permute.xlu0 %562
        %564 = vrot.lane.b32.xlu0 %v486, 8
        %v565 = vpop.permute.xlu0 %564
        %566 = vrot.lane.b32.xlu0 %v487, 8
        %v567 = vpop.permute.xlu0 %566
        %568 = vrot.lane.b32.xlu0 %v488, 8
        %v569 = vpop.permute.xlu0 %568
        %570 = vrot.lane.b32.xlu0 %v489, 8
        %v571 = vpop.permute.xlu0 %570
        %572 = vrot.lane.b32.xlu0 %v490, 8
        %v573 = vpop.permute.xlu0 %572
        %574 = vrot.lane.b32.xlu0 %v491, 8
        %v575 = vpop.permute.xlu0 %574
        %576 = vrot.lane.b32.xlu0 %v492, 8
        %v577 = vpop.permute.xlu0 %576
        %578 = vrot.lane.b32.xlu0 %v493, 8
        %v579 = vpop.permute.xlu0 %578
        %580 = vrot.lane.b32.xlu0 %v494, 8
        %v581 = vpop.permute.xlu0 %580
        %582 = vrot.lane.b32.xlu0 %v495, 8
        %v583 = vpop.permute.xlu0 %582
        %584 = vrot.lane.b32.xlu0 %v496, 8
        %v585 = vpop.permute.xlu0 %584
        %586 = vrot.lane.b32.xlu0 %v497, 8
        %v587 = vpop.permute.xlu0 %586
        %588 = vrot.lane.b32.xlu0 %v498, 8
        %v589 = vpop.permute.xlu0 %588
        %590 = vrot.lane.b32.xlu0 %v499, 8
        %v591 = vpop.permute.xlu0 %590
        %592 = vrot.lane.b32.xlu0 %v500, 8
        %v593 = vpop.permute.xlu0 %592
        %594 = vrot.lane.b32.xlu0 %v501, 8
        %v595 = vpop.permute.xlu0 %594
        %596 = vrot.lane.b32.xlu0 %v502, 8
        %v597 = vpop.permute.xlu0 %596
        %598 = vrot.lane.b32.xlu0 %v503, 8
        %v599 = vpop.permute.xlu0 %598
        %vm632 = vcmask 97344
        %633 = vst.msk [vmem:[#allocation2] sm:$0xff] %vm632, %v537
        %634 = vst.msk [vmem:[#allocation2 + $0x8] sm:$0xff] %vm632, %v539
        %635 = vst.msk [vmem:[#allocation2 + $0x10] sm:$0xff] %vm632, %v541
        %636 = vst.msk [vmem:[#allocation2 + $0x18] sm:$0xff] %vm632, %v543
        %637 = vst.msk [vmem:[#allocation2 + $0x20] sm:$0xff] %vm632, %v545
        %638 = vst.msk [vmem:[#allocation2 + $0x28] sm:$0xff] %vm632, %v547
        %639 = vst.msk [vmem:[#allocation2 + $0x30] sm:$0xff] %vm632, %v549
        %640 = vst.msk [vmem:[#allocation2 + $0x38] sm:$0xff] %vm632, %v551
        %641 = vst.msk [vmem:[#allocation2 + $0x40] sm:$0xff] %vm632, %v553
        %642 = vst.msk [vmem:[#allocation2 + $0x48] sm:$0xff] %vm632, %v555
        %643 = vst.msk [vmem:[#allocation2 + $0x50] sm:$0xff] %vm632, %v557
        %644 = vst.msk [vmem:[#allocation2 + $0x58] sm:$0xff] %vm632, %v559
        %645 = vst.msk [vmem:[#allocation2 + $0x60] sm:$0xff] %vm632, %v561
        %646 = vst.msk [vmem:[#allocation2 + $0x68] sm:$0xff] %vm632, %v563
        %647 = vst.msk [vmem:[#allocation2 + $0x70] sm:$0xff] %vm632, %v565
        %648 = vst.msk [vmem:[#allocation2 + $0x78] sm:$0xff] %vm632, %v567
        %649 = vst.msk [vmem:[#allocation2 + $0x80] sm:$0xff] %vm632, %v569
        %650 = vst.msk [vmem:[#allocation2 + $0x88] sm:$0xff] %vm632, %v571
        %651 = vst.msk [vmem:[#allocation2 + $0x90] sm:$0xff] %vm632, %v573
        %652 = vst.msk [vmem:[#allocation2 + $0x98] sm:$0xff] %vm632, %v575
        %653 = vst.msk [vmem:[#allocation2 + $0xa0] sm:$0xff] %vm632, %v577
        %654 = vst.msk [vmem:[#allocation2 + $0xa8] sm:$0xff] %vm632, %v579
        %655 = vst.msk [vmem:[#allocation2 + $0xb0] sm:$0xff] %vm632, %v581
        %656 = vst.msk [vmem:[#allocation2 + $0xb8] sm:$0xff] %vm632, %v583
        %657 = vst.msk [vmem:[#allocation2 + $0xc0] sm:$0xff] %vm632, %v585
        %658 = vst.msk [vmem:[#allocation2 + $0xc8] sm:$0xff] %vm632, %v587
        %659 = vst.msk [vmem:[#allocation2 + $0xd0] sm:$0xff] %vm632, %v589
        %660 = vst.msk [vmem:[#allocation2 + $0xd8] sm:$0xff] %vm632, %v591
        %661 = vst.msk [vmem:[#allocation2 + $0xe0] sm:$0xff] %vm632, %v593
        %662 = vst.msk [vmem:[#allocation2 + $0xe8] sm:$0xff] %vm632, %v595
        %663 = vst.msk [vmem:[#allocation2 + $0xf0] sm:$0xff] %vm632, %v597
        %664 = vst.msk [vmem:[#allocation2 + $0xf8] sm:$0xff] %vm632, %v599
        %s665 = scalar_lea.vmem %s211, 24
        %v666 = vld [vmem:[%s665] sm:$0xff]
        %v667 = vld [vmem:[%s665 + $0x8] sm:$0xff]
        %v668 = vld [vmem:[%s665 + $0x18] sm:$0xff]
        %v669 = vld [vmem:[%s665 + $0x20] sm:$0xff]
        %v670 = vld [vmem:[%s665 + $0x30] sm:$0xff]
        %v671 = vld [vmem:[%s665 + $0x38] sm:$0xff]
        %v672 = vld [vmem:[%s665 + $0x48] sm:$0xff]
        %v673 = vld [vmem:[%s665 + $0x50] sm:$0xff]
        %v674 = vld [vmem:[%s665 + $0x60] sm:$0xff]
        %v675 = vld [vmem:[%s665 + $0x68] sm:$0xff]
        %v676 = vld [vmem:[%s665 + $0x78] sm:$0xff]
        %v677 = vld [vmem:[%s665 + $0x80] sm:$0xff]
        %v678 = vld [vmem:[%s665 + $0x90] sm:$0xff]
        %v679 = vld [vmem:[%s665 + $0x98] sm:$0xff]
        %v680 = vld [vmem:[%s665 + $0xa8] sm:$0xff]
        %v681 = vld [vmem:[%s665 + $0xb0] sm:$0xff]
        %v682 = vld [vmem:[%s665 + $0xc0] sm:$0xff]
        %v683 = vld [vmem:[%s665 + $0xc8] sm:$0xff]
        %v684 = vld [vmem:[%s665 + $0xd8] sm:$0xff]
        %v685 = vld [vmem:[%s665 + $0xe0] sm:$0xff]
        %v686 = vld [vmem:[%s665 + $0xf0] sm:$0xff]
        %v687 = vld [vmem:[%s665 + $0xf8] sm:$0xff]
        %v688 = vld [vmem:[%s665 + $0x108] sm:$0xff]
        %v689 = vld [vmem:[%s665 + $0x110] sm:$0xff]
        %v690 = vld [vmem:[%s665 + $0x120] sm:$0xff]
        %v691 = vld [vmem:[%s665 + $0x128] sm:$0xff]
        %v692 = vld [vmem:[%s665 + $0x138] sm:$0xff]
        %v693 = vld [vmem:[%s665 + $0x140] sm:$0xff]
        %v694 = vld [vmem:[%s665 + $0x150] sm:$0xff]
        %v695 = vld [vmem:[%s665 + $0x158] sm:$0xff]
        %v696 = vld [vmem:[%s665 + $0x168] sm:$0xff]
        %v697 = vld [vmem:[%s665 + $0x170] sm:$0xff]
        %730 = vrot.lane.b32.xlu0 %v666, 12
        %v731 = vpop.permute.xlu0 %730
        %732 = vrot.lane.b32.xlu0 %v667, 12
        %v733 = vpop.permute.xlu0 %732
        %734 = vrot.lane.b32.xlu0 %v668, 12
        %v735 = vpop.permute.xlu0 %734
        %736 = vrot.lane.b32.xlu0 %v669, 12
        %v737 = vpop.permute.xlu0 %736
        %738 = vrot.lane.b32.xlu0 %v670, 12
        %v739 = vpop.permute.xlu0 %738
        %740 = vrot.lane.b32.xlu0 %v671, 12
        %v741 = vpop.permute.xlu0 %740
        %742 = vrot.lane.b32.xlu0 %v672, 12
        %v743 = vpop.permute.xlu0 %742
        %744 = vrot.lane.b32.xlu0 %v673, 12
        %v745 = vpop.permute.xlu0 %744
        %746 = vrot.lane.b32.xlu0 %v674, 12
        %v747 = vpop.permute.xlu0 %746
        %748 = vrot.lane.b32.xlu0 %v675, 12
        %v749 = vpop.permute.xlu0 %748
        %750 = vrot.lane.b32.xlu0 %v676, 12
        %v751 = vpop.permute.xlu0 %750
        %752 = vrot.lane.b32.xlu0 %v677, 12
        %v753 = vpop.permute.xlu0 %752
        %754 = vrot.lane.b32.xlu0 %v678, 12
        %v755 = vpop.permute.xlu0 %754
        %756 = vrot.lane.b32.xlu0 %v679, 12
        %v757 = vpop.permute.xlu0 %756
        %758 = vrot.lane.b32.xlu0 %v680, 12
        %v759 = vpop.permute.xlu0 %758
        %760 = vrot.lane.b32.xlu0 %v681, 12
        %v761 = vpop.permute.xlu0 %760
        %762 = vrot.lane.b32.xlu0 %v682, 12
        %v763 = vpop.permute.xlu0 %762
        %764 = vrot.lane.b32.xlu0 %v683, 12
        %v765 = vpop.permute.xlu0 %764
        %766 = vrot.lane.b32.xlu0 %v684, 12
        %v767 = vpop.permute.xlu0 %766
        %768 = vrot.lane.b32.xlu0 %v685, 12
        %v769 = vpop.permute.xlu0 %768
        %770 = vrot.lane.b32.xlu0 %v686, 12
        %v771 = vpop.permute.xlu0 %770
        %772 = vrot.lane.b32.xlu0 %v687, 12
        %v773 = vpop.permute.xlu0 %772
        %774 = vrot.lane.b32.xlu0 %v688, 12
        %v775 = vpop.permute.xlu0 %774
        %776 = vrot.lane.b32.xlu0 %v689, 12
        %v777 = vpop.permute.xlu0 %776
        %778 = vrot.lane.b32.xlu0 %v690, 12
        %v779 = vpop.permute.xlu0 %778
        %780 = vrot.lane.b32.xlu0 %v691, 12
        %v781 = vpop.permute.xlu0 %780
        %782 = vrot.lane.b32.xlu0 %v692, 12
        %v783 = vpop.permute.xlu0 %782
        %784 = vrot.lane.b32.xlu0 %v693, 12
        %v785 = vpop.permute.xlu0 %784
        %786 = vrot.lane.b32.xlu0 %v694, 12
        %v787 = vpop.permute.xlu0 %786
        %788 = vrot.lane.b32.xlu0 %v695, 12
        %v789 = vpop.permute.xlu0 %788
        %790 = vrot.lane.b32.xlu0 %v696, 12
        %v791 = vpop.permute.xlu0 %790
        %792 = vrot.lane.b32.xlu0 %v697, 12
        %v793 = vpop.permute.xlu0 %792
        %vm826 = vcmask 130144
        %827 = vst.msk [vmem:[#allocation2] sm:$0xff] %vm826, %v731
        %828 = vst.msk [vmem:[#allocation2 + $0x8] sm:$0xff] %vm826, %v733
        %829 = vst.msk [vmem:[#allocation2 + $0x10] sm:$0xff] %vm826, %v735
        %830 = vst.msk [vmem:[#allocation2 + $0x18] sm:$0xff] %vm826, %v737
        %831 = vst.msk [vmem:[#allocation2 + $0x20] sm:$0xff] %vm826, %v739
        %832 = vst.msk [vmem:[#allocation2 + $0x28] sm:$0xff] %vm826, %v741
        %833 = vst.msk [vmem:[#allocation2 + $0x30] sm:$0xff] %vm826, %v743
        %834 = vst.msk [vmem:[#allocation2 + $0x38] sm:$0xff] %vm826, %v745
        %835 = vst.msk [vmem:[#allocation2 + $0x40] sm:$0xff] %vm826, %v747
        %836 = vst.msk [vmem:[#allocation2 + $0x48] sm:$0xff] %vm826, %v749
        %837 = vst.msk [vmem:[#allocation2 + $0x50] sm:$0xff] %vm826, %v751
        %838 = vst.msk [vmem:[#allocation2 + $0x58] sm:$0xff] %vm826, %v753
        %839 = vst.msk [vmem:[#allocation2 + $0x60] sm:$0xff] %vm826, %v755
        %840 = vst.msk [vmem:[#allocation2 + $0x68] sm:$0xff] %vm826, %v757
        %841 = vst.msk [vmem:[#allocation2 + $0x70] sm:$0xff] %vm826, %v759
        %842 = vst.msk [vmem:[#allocation2 + $0x78] sm:$0xff] %vm826, %v761
        %843 = vst.msk [vmem:[#allocation2 + $0x80] sm:$0xff] %vm826, %v763
        %844 = vst.msk [vmem:[#allocation2 + $0x88] sm:$0xff] %vm826, %v765
        %845 = vst.msk [vmem:[#allocation2 + $0x90] sm:$0xff] %vm826, %v767
        %846 = vst.msk [vmem:[#allocation2 + $0x98] sm:$0xff] %vm826, %v769
        %847 = vst.msk [vmem:[#allocation2 + $0xa0] sm:$0xff] %vm826, %v771
        %848 = vst.msk [vmem:[#allocation2 + $0xa8] sm:$0xff] %vm826, %v773
        %849 = vst.msk [vmem:[#allocation2 + $0xb0] sm:$0xff] %vm826, %v775
        %850 = vst.msk [vmem:[#allocation2 + $0xb8] sm:$0xff] %vm826, %v777
        %851 = vst.msk [vmem:[#allocation2 + $0xc0] sm:$0xff] %vm826, %v779
        %852 = vst.msk [vmem:[#allocation2 + $0xc8] sm:$0xff] %vm826, %v781
        %853 = vst.msk [vmem:[#allocation2 + $0xd0] sm:$0xff] %vm826, %v783
        %854 = vst.msk [vmem:[#allocation2 + $0xd8] sm:$0xff] %vm826, %v785
        %855 = vst.msk [vmem:[#allocation2 + $0xe0] sm:$0xff] %vm826, %v787
        %856 = vst.msk [vmem:[#allocation2 + $0xe8] sm:$0xff] %vm826, %v789
        %857 = vst.msk [vmem:[#allocation2 + $0xf0] sm:$0xff] %vm826, %v791
        %858 = vst.msk [vmem:[#allocation2 + $0xf8] sm:$0xff] %vm826, %v793
        %v859 = vld [vmem:[%s665 + $0x1] sm:$0xff]
        %v860 = vld [vmem:[%s665 + $0x9] sm:$0xff]
        %v861 = vld [vmem:[%s665 + $0x19] sm:$0xff]
        %v862 = vld [vmem:[%s665 + $0x21] sm:$0xff]
        %v863 = vld [vmem:[%s665 + $0x31] sm:$0xff]
        %v864 = vld [vmem:[%s665 + $0x39] sm:$0xff]
        %v865 = vld [vmem:[%s665 + $0x49] sm:$0xff]
        %v866 = vld [vmem:[%s665 + $0x51] sm:$0xff]
        %v867 = vld [vmem:[%s665 + $0x61] sm:$0xff]
        %v868 = vld [vmem:[%s665 + $0x69] sm:$0xff]
        %v869 = vld [vmem:[%s665 + $0x79] sm:$0xff]
        %v870 = vld [vmem:[%s665 + $0x81] sm:$0xff]
        %v871 = vld [vmem:[%s665 + $0x91] sm:$0xff]
        %v872 = vld [vmem:[%s665 + $0x99] sm:$0xff]
        %v873 = vld [vmem:[%s665 + $0xa9] sm:$0xff]
        %v874 = vld [vmem:[%s665 + $0xb1] sm:$0xff]
        %v875 = vld [vmem:[%s665 + $0xc1] sm:$0xff]
        %v876 = vld [vmem:[%s665 + $0xc9] sm:$0xff]
        %v877 = vld [vmem:[%s665 + $0xd9] sm:$0xff]
        %v878 = vld [vmem:[%s665 + $0xe1] sm:$0xff]
        %v879 = vld [vmem:[%s665 + $0xf1] sm:$0xff]
        %v880 = vld [vmem:[%s665 + $0xf9] sm:$0xff]
        %v881 = vld [vmem:[%s665 + $0x109] sm:$0xff]
        %v882 = vld [vmem:[%s665 + $0x111] sm:$0xff]
        %v883 = vld [vmem:[%s665 + $0x121] sm:$0xff]
        %v884 = vld [vmem:[%s665 + $0x129] sm:$0xff]
        %v885 = vld [vmem:[%s665 + $0x139] sm:$0xff]
        %v886 = vld [vmem:[%s665 + $0x141] sm:$0xff]
        %v887 = vld [vmem:[%s665 + $0x151] sm:$0xff]
        %v888 = vld [vmem:[%s665 + $0x159] sm:$0xff]
        %v889 = vld [vmem:[%s665 + $0x169] sm:$0xff]
        %v890 = vld [vmem:[%s665 + $0x171] sm:$0xff]
        %923 = vrot.lane.b32.xlu0 %v859, 16
        %v924 = vpop.permute.xlu0 %923
        %925 = vrot.lane.b32.xlu0 %v860, 16
        %v926 = vpop.permute.xlu0 %925
        %927 = vrot.lane.b32.xlu0 %v861, 16
        %v928 = vpop.permute.xlu0 %927
        %929 = vrot.lane.b32.xlu0 %v862, 16
        %v930 = vpop.permute.xlu0 %929
        %931 = vrot.lane.b32.xlu0 %v863, 16
        %v932 = vpop.permute.xlu0 %931
        %933 = vrot.lane.b32.xlu0 %v864, 16
        %v934 = vpop.permute.xlu0 %933
        %935 = vrot.lane.b32.xlu0 %v865, 16
        %v936 = vpop.permute.xlu0 %935
        %937 = vrot.lane.b32.xlu0 %v866, 16
        %v938 = vpop.permute.xlu0 %937
        %939 = vrot.lane.b32.xlu0 %v867, 16
        %v940 = vpop.permute.xlu0 %939
        %941 = vrot.lane.b32.xlu0 %v868, 16
        %v942 = vpop.permute.xlu0 %941
        %943 = vrot.lane.b32.xlu0 %v869, 16
        %v944 = vpop.permute.xlu0 %943
        %945 = vrot.lane.b32.xlu0 %v870, 16
        %v946 = vpop.permute.xlu0 %945
        %947 = vrot.lane.b32.xlu0 %v871, 16
        %v948 = vpop.permute.xlu0 %947
        %949 = vrot.lane.b32.xlu0 %v872, 16
        %v950 = vpop.permute.xlu0 %949
        %951 = vrot.lane.b32.xlu0 %v873, 16
        %v952 = vpop.permute.xlu0 %951
        %953 = vrot.lane.b32.xlu0 %v874, 16
        %v954 = vpop.permute.xlu0 %953
        %955 = vrot.lane.b32.xlu0 %v875, 16
        %v956 = vpop.permute.xlu0 %955
        %957 = vrot.lane.b32.xlu0 %v876, 16
        %v958 = vpop.permute.xlu0 %957
        %959 = vrot.lane.b32.xlu0 %v877, 16
        %v960 = vpop.permute.xlu0 %959
        %961 = vrot.lane.b32.xlu0 %v878, 16
        %v962 = vpop.permute.xlu0 %961
        %963 = vrot.lane.b32.xlu0 %v879, 16
        %v964 = vpop.permute.xlu0 %963
        %965 = vrot.lane.b32.xlu0 %v880, 16
        %v966 = vpop.permute.xlu0 %965
        %967 = vrot.lane.b32.xlu0 %v881, 16
        %v968 = vpop.permute.xlu0 %967
        %969 = vrot.lane.b32.xlu0 %v882, 16
        %v970 = vpop.permute.xlu0 %969
        %971 = vrot.lane.b32.xlu0 %v883, 16
        %v972 = vpop.permute.xlu0 %971
        %973 = vrot.lane.b32.xlu0 %v884, 16
        %v974 = vpop.permute.xlu0 %973
        %975 = vrot.lane.b32.xlu0 %v885, 16
        %v976 = vpop.permute.xlu0 %975
        %977 = vrot.lane.b32.xlu0 %v886, 16
        %v978 = vpop.permute.xlu0 %977
        %979 = vrot.lane.b32.xlu0 %v887, 16
        %v980 = vpop.permute.xlu0 %979
        %981 = vrot.lane.b32.xlu0 %v888, 16
        %v982 = vpop.permute.xlu0 %981
        %983 = vrot.lane.b32.xlu0 %v889, 16
        %v984 = vpop.permute.xlu0 %983
        %985 = vrot.lane.b32.xlu0 %v890, 16
        %v986 = vpop.permute.xlu0 %985
        %vm1019 = vcmask 162944
        %1020 = vst.msk [vmem:[#allocation2] sm:$0xff] %vm1019, %v924
        %1021 = vst.msk [vmem:[#allocation2 + $0x8] sm:$0xff] %vm1019, %v926
        %1022 = vst.msk [vmem:[#allocation2 + $0x10] sm:$0xff] %vm1019, %v928
        %1023 = vst.msk [vmem:[#allocation2 + $0x18] sm:$0xff] %vm1019, %v930
        %1024 = vst.msk [vmem:[#allocation2 + $0x20] sm:$0xff] %vm1019, %v932
        %1025 = vst.msk [vmem:[#allocation2 + $0x28] sm:$0xff] %vm1019, %v934
        %1026 = vst.msk [vmem:[#allocation2 + $0x30] sm:$0xff] %vm1019, %v936
        %1027 = vst.msk [vmem:[#allocation2 + $0x38] sm:$0xff] %vm1019, %v938
        %1028 = vst.msk [vmem:[#allocation2 + $0x40] sm:$0xff] %vm1019, %v940
        %1029 = vst.msk [vmem:[#allocation2 + $0x48] sm:$0xff] %vm1019, %v942
        %1030 = vst.msk [vmem:[#allocation2 + $0x50] sm:$0xff] %vm1019, %v944
        %1031 = vst.msk [vmem:[#allocation2 + $0x58] sm:$0xff] %vm1019, %v946
        %1032 = vst.msk [vmem:[#allocation2 + $0x60] sm:$0xff] %vm1019, %v948
        %1033 = vst.msk [vmem:[#allocation2 + $0x68] sm:$0xff] %vm1019, %v950
        %1034 = vst.msk [vmem:[#allocation2 + $0x70] sm:$0xff] %vm1019, %v952
        %1035 = vst.msk [vmem:[#allocation2 + $0x78] sm:$0xff] %vm1019, %v954
        %1036 = vst.msk [vmem:[#allocation2 + $0x80] sm:$0xff] %vm1019, %v956
        %1037 = vst.msk [vmem:[#allocation2 + $0x88] sm:$0xff] %vm1019, %v958
        %1038 = vst.msk [vmem:[#allocation2 + $0x90] sm:$0xff] %vm1019, %v960
        %1039 = vst.msk [vmem:[#allocation2 + $0x98] sm:$0xff] %vm1019, %v962
        %1040 = vst.msk [vmem:[#allocation2 + $0xa0] sm:$0xff] %vm1019, %v964
        %1041 = vst.msk [vmem:[#allocation2 + $0xa8] sm:$0xff] %vm1019, %v966
        %1042 = vst.msk [vmem:[#allocation2 + $0xb0] sm:$0xff] %vm1019, %v968
        %1043 = vst.msk [vmem:[#allocation2 + $0xb8] sm:$0xff] %vm1019, %v970
        %1044 = vst.msk [vmem:[#allocation2 + $0xc0] sm:$0xff] %vm1019, %v972
        %1045 = vst.msk [vmem:[#allocation2 + $0xc8] sm:$0xff] %vm1019, %v974
        %1046 = vst.msk [vmem:[#allocation2 + $0xd0] sm:$0xff] %vm1019, %v976
        %1047 = vst.msk [vmem:[#allocation2 + $0xd8] sm:$0xff] %vm1019, %v978
        %1048 = vst.msk [vmem:[#allocation2 + $0xe0] sm:$0xff] %vm1019, %v980
        %1049 = vst.msk [vmem:[#allocation2 + $0xe8] sm:$0xff] %vm1019, %v982
        %1050 = vst.msk [vmem:[#allocation2 + $0xf0] sm:$0xff] %vm1019, %v984
        %1051 = vst.msk [vmem:[#allocation2 + $0xf8] sm:$0xff] %vm1019, %v986
        %v1052 = vld [vmem:[%s665 + $0x2] sm:$0xff]
        %v1053 = vld [vmem:[%s665 + $0xa] sm:$0xff]
        %v1054 = vld [vmem:[%s665 + $0x1a] sm:$0xff]
        %v1055 = vld [vmem:[%s665 + $0x22] sm:$0xff]
        %v1056 = vld [vmem:[%s665 + $0x32] sm:$0xff]
        %v1057 = vld [vmem:[%s665 + $0x3a] sm:$0xff]
        %v1058 = vld [vmem:[%s665 + $0x4a] sm:$0xff]
        %v1059 = vld [vmem:[%s665 + $0x52] sm:$0xff]
        %v1060 = vld [vmem:[%s665 + $0x62] sm:$0xff]
        %v1061 = vld [vmem:[%s665 + $0x6a] sm:$0xff]
        %v1062 = vld [vmem:[%s665 + $0x7a] sm:$0xff]
        %v1063 = vld [vmem:[%s665 + $0x82] sm:$0xff]
        %v1064 = vld [vmem:[%s665 + $0x92] sm:$0xff]
        %v1065 = vld [vmem:[%s665 + $0x9a] sm:$0xff]
        %v1066 = vld [vmem:[%s665 + $0xaa] sm:$0xff]
        %v1067 = vld [vmem:[%s665 + $0xb2] sm:$0xff]
        %v1068 = vld [vmem:[%s665 + $0xc2] sm:$0xff]
        %v1069 = vld [vmem:[%s665 + $0xca] sm:$0xff]
        %v1070 = vld [vmem:[%s665 + $0xda] sm:$0xff]
        %v1071 = vld [vmem:[%s665 + $0xe2] sm:$0xff]
        %v1072 = vld [vmem:[%s665 + $0xf2] sm:$0xff]
        %v1073 = vld [vmem:[%s665 + $0xfa] sm:$0xff]
        %v1074 = vld [vmem:[%s665 + $0x10a] sm:$0xff]
        %v1075 = vld [vmem:[%s665 + $0x112] sm:$0xff]
        %v1076 = vld [vmem:[%s665 + $0x122] sm:$0xff]
        %v1077 = vld [vmem:[%s665 + $0x12a] sm:$0xff]
        %v1078 = vld [vmem:[%s665 + $0x13a] sm:$0xff]
        %v1079 = vld [vmem:[%s665 + $0x142] sm:$0xff]
        %v1080 = vld [vmem:[%s665 + $0x152] sm:$0xff]
        %v1081 = vld [vmem:[%s665 + $0x15a] sm:$0xff]
        %v1082 = vld [vmem:[%s665 + $0x16a] sm:$0xff]
        %v1083 = vld [vmem:[%s665 + $0x172] sm:$0xff]
        %1116 = vrot.lane.b32.xlu0 %v1052, 20
        %v1117 = vpop.permute.xlu0 %1116
        %1118 = vrot.lane.b32.xlu0 %v1053, 20
        %v1119 = vpop.permute.xlu0 %1118
        %1120 = vrot.lane.b32.xlu0 %v1054, 20
        %v1121 = vpop.permute.xlu0 %1120
        %1122 = vrot.lane.b32.xlu0 %v1055, 20
        %v1123 = vpop.permute.xlu0 %1122
        %1124 = vrot.lane.b32.xlu0 %v1056, 20
        %v1125 = vpop.permute.xlu0 %1124
        %1126 = vrot.lane.b32.xlu0 %v1057, 20
        %v1127 = vpop.permute.xlu0 %1126
        %1128 = vrot.lane.b32.xlu0 %v1058, 20
        %v1129 = vpop.permute.xlu0 %1128
        %1130 = vrot.lane.b32.xlu0 %v1059, 20
        %v1131 = vpop.permute.xlu0 %1130
        %1132 = vrot.lane.b32.xlu0 %v1060, 20
        %v1133 = vpop.permute.xlu0 %1132
        %1134 = vrot.lane.b32.xlu0 %v1061, 20
        %v1135 = vpop.permute.xlu0 %1134
        %1136 = vrot.lane.b32.xlu0 %v1062, 20
        %v1137 = vpop.permute.xlu0 %1136
        %1138 = vrot.lane.b32.xlu0 %v1063, 20
        %v1139 = vpop.permute.xlu0 %1138
        %1140 = vrot.lane.b32.xlu0 %v1064, 20
        %v1141 = vpop.permute.xlu0 %1140
        %1142 = vrot.lane.b32.xlu0 %v1065, 20
        %v1143 = vpop.permute.xlu0 %1142
        %1144 = vrot.lane.b32.xlu0 %v1066, 20
        %v1145 = vpop.permute.xlu0 %1144
        %1146 = vrot.lane.b32.xlu0 %v1067, 20
        %v1147 = vpop.permute.xlu0 %1146
        %1148 = vrot.lane.b32.xlu0 %v1068, 20
        %v1149 = vpop.permute.xlu0 %1148
        %1150 = vrot.lane.b32.xlu0 %v1069, 20
        %v1151 = vpop.permute.xlu0 %1150
        %1152 = vrot.lane.b32.xlu0 %v1070, 20
        %v1153 = vpop.permute.xlu0 %1152
        %1154 = vrot.lane.b32.xlu0 %v1071, 20
        %v1155 = vpop.permute.xlu0 %1154
        %1156 = vrot.lane.b32.xlu0 %v1072, 20
        %v1157 = vpop.permute.xlu0 %1156
        %1158 = vrot.lane.b32.xlu0 %v1073, 20
        %v1159 = vpop.permute.xlu0 %1158
        %1160 = vrot.lane.b32.xlu0 %v1074, 20
        %v1161 = vpop.permute.xlu0 %1160
        %1162 = vrot.lane.b32.xlu0 %v1075, 20
        %v1163 = vpop.permute.xlu0 %1162
        %1164 = vrot.lane.b32.xlu0 %v1076, 20
        %v1165 = vpop.permute.xlu0 %1164
        %1166 = vrot.lane.b32.xlu0 %v1077, 20
        %v1167 = vpop.permute.xlu0 %1166
        %1168 = vrot.lane.b32.xlu0 %v1078, 20
        %v1169 = vpop.permute.xlu0 %1168
        %1170 = vrot.lane.b32.xlu0 %v1079, 20
        %v1171 = vpop.permute.xlu0 %1170
        %1172 = vrot.lane.b32.xlu0 %v1080, 20
        %v1173 = vpop.permute.xlu0 %1172
        %1174 = vrot.lane.b32.xlu0 %v1081, 20
        %v1175 = vpop.permute.xlu0 %1174
        %1176 = vrot.lane.b32.xlu0 %v1082, 20
        %v1177 = vpop.permute.xlu0 %1176
        %1178 = vrot.lane.b32.xlu0 %v1083, 20
        %v1179 = vpop.permute.xlu0 %1178
        %vm1212 = vcmask 195744
        %1213 = vst.msk [vmem:[#allocation2] sm:$0xff] %vm1212, %v1117
        %1214 = vst.msk [vmem:[#allocation2 + $0x8] sm:$0xff] %vm1212, %v1119
        %1215 = vst.msk [vmem:[#allocation2 + $0x10] sm:$0xff] %vm1212, %v1121
        %1216 = vst.msk [vmem:[#allocation2 + $0x18] sm:$0xff] %vm1212, %v1123
        %1217 = vst.msk [vmem:[#allocation2 + $0x20] sm:$0xff] %vm1212, %v1125
        %1218 = vst.msk [vmem:[#allocation2 + $0x28] sm:$0xff] %vm1212, %v1127
        %1219 = vst.msk [vmem:[#allocation2 + $0x30] sm:$0xff] %vm1212, %v1129
        %1220 = vst.msk [vmem:[#allocation2 + $0x38] sm:$0xff] %vm1212, %v1131
        %1221 = vst.msk [vmem:[#allocation2 + $0x40] sm:$0xff] %vm1212, %v1133
        %1222 = vst.msk [vmem:[#allocation2 + $0x48] sm:$0xff] %vm1212, %v1135
        %1223 = vst.msk [vmem:[#allocation2 + $0x50] sm:$0xff] %vm1212, %v1137
        %1224 = vst.msk [vmem:[#allocation2 + $0x58] sm:$0xff] %vm1212, %v1139
        %1225 = vst.msk [vmem:[#allocation2 + $0x60] sm:$0xff] %vm1212, %v1141
        %1226 = vst.msk [vmem:[#allocation2 + $0x68] sm:$0xff] %vm1212, %v1143
        %1227 = vst.msk [vmem:[#allocation2 + $0x70] sm:$0xff] %vm1212, %v1145
        %1228 = vst.msk [vmem:[#allocation2 + $0x78] sm:$0xff] %vm1212, %v1147
        %1229 = vst.msk [vmem:[#allocation2 + $0x80] sm:$0xff] %vm1212, %v1149
        %1230 = vst.msk [vmem:[#allocation2 + $0x88] sm:$0xff] %vm1212, %v1151
        %1231 = vst.msk [vmem:[#allocation2 + $0x90] sm:$0xff] %vm1212, %v1153
        %1232 = vst.msk [vmem:[#allocation2 + $0x98] sm:$0xff] %vm1212, %v1155
        %1233 = vst.msk [vmem:[#allocation2 + $0xa0] sm:$0xff] %vm1212, %v1157
        %1234 = vst.msk [vmem:[#allocation2 + $0xa8] sm:$0xff] %vm1212, %v1159
        %1235 = vst.msk [vmem:[#allocation2 + $0xb0] sm:$0xff] %vm1212, %v1161
        %1236 = vst.msk [vmem:[#allocation2 + $0xb8] sm:$0xff] %vm1212, %v1163
        %1237 = vst.msk [vmem:[#allocation2 + $0xc0] sm:$0xff] %vm1212, %v1165
        %1238 = vst.msk [vmem:[#allocation2 + $0xc8] sm:$0xff] %vm1212, %v1167
        %1239 = vst.msk [vmem:[#allocation2 + $0xd0] sm:$0xff] %vm1212, %v1169
        %1240 = vst.msk [vmem:[#allocation2 + $0xd8] sm:$0xff] %vm1212, %v1171
        %1241 = vst.msk [vmem:[#allocation2 + $0xe0] sm:$0xff] %vm1212, %v1173
        %1242 = vst.msk [vmem:[#allocation2 + $0xe8] sm:$0xff] %vm1212, %v1175
        %1243 = vst.msk [vmem:[#allocation2 + $0xf0] sm:$0xff] %vm1212, %v1177
        %1244 = vst.msk [vmem:[#allocation2 + $0xf8] sm:$0xff] %vm1212, %v1179
        %s1245 = scalar_lea.vmem %s211, 48
        %v1246 = vld [vmem:[%s1245] sm:$0xff]
        %v1247 = vld [vmem:[%s1245 + $0x8] sm:$0xff]
        %v1248 = vld [vmem:[%s1245 + $0x18] sm:$0xff]
        %v1249 = vld [vmem:[%s1245 + $0x20] sm:$0xff]
        %v1250 = vld [vmem:[%s1245 + $0x30] sm:$0xff]
        %v1251 = vld [vmem:[%s1245 + $0x38] sm:$0xff]
        %v1252 = vld [vmem:[%s1245 + $0x48] sm:$0xff]
        %v1253 = vld [vmem:[%s1245 + $0x50] sm:$0xff]
        %v1254 = vld [vmem:[%s1245 + $0x60] sm:$0xff]
        %v1255 = vld [vmem:[%s1245 + $0x68] sm:$0xff]
        %v1256 = vld [vmem:[%s1245 + $0x78] sm:$0xff]
        %v1257 = vld [vmem:[%s1245 + $0x80] sm:$0xff]
        %v1258 = vld [vmem:[%s1245 + $0x90] sm:$0xff]
        %v1259 = vld [vmem:[%s1245 + $0x98] sm:$0xff]
        %v1260 = vld [vmem:[%s1245 + $0xa8] sm:$0xff]
        %v1261 = vld [vmem:[%s1245 + $0xb0] sm:$0xff]
        %v1262 = vld [vmem:[%s1245 + $0xc0] sm:$0xff]
        %v1263 = vld [vmem:[%s1245 + $0xc8] sm:$0xff]
        %v1264 = vld [vmem:[%s1245 + $0xd8] sm:$0xff]
        %v1265 = vld [vmem:[%s1245 + $0xe0] sm:$0xff]
        %v1266 = vld [vmem:[%s1245 + $0xf0] sm:$0xff]
        %v1267 = vld [vmem:[%s1245 + $0xf8] sm:$0xff]
        %v1268 = vld [vmem:[%s1245 + $0x108] sm:$0xff]
        %v1269 = vld [vmem:[%s1245 + $0x110] sm:$0xff]
        %v1270 = vld [vmem:[%s1245 + $0x120] sm:$0xff]
        %v1271 = vld [vmem:[%s1245 + $0x128] sm:$0xff]
        %v1272 = vld [vmem:[%s1245 + $0x138] sm:$0xff]
        %v1273 = vld [vmem:[%s1245 + $0x140] sm:$0xff]
        %v1274 = vld [vmem:[%s1245 + $0x150] sm:$0xff]
        %v1275 = vld [vmem:[%s1245 + $0x158] sm:$0xff]
        %v1276 = vld [vmem:[%s1245 + $0x168] sm:$0xff]
        %v1277 = vld [vmem:[%s1245 + $0x170] sm:$0xff]
        %1310 = vrot.lane.b32.xlu0 %v1246, 24
        %v1311 = vpop.permute.xlu0 %1310
        %1312 = vrot.lane.b32.xlu0 %v1247, 24
        %v1313 = vpop.permute.xlu0 %1312
        %1314 = vrot.lane.b32.xlu0 %v1248, 24
        %v1315 = vpop.permute.xlu0 %1314
        %1316 = vrot.lane.b32.xlu0 %v1249, 24
        %v1317 = vpop.permute.xlu0 %1316
        %1318 = vrot.lane.b32.xlu0 %v1250, 24
        %v1319 = vpop.permute.xlu0 %1318
        %1320 = vrot.lane.b32.xlu0 %v1251, 24
        %v1321 = vpop.permute.xlu0 %1320
        %1322 = vrot.lane.b32.xlu0 %v1252, 24
        %v1323 = vpop.permute.xlu0 %1322
        %1324 = vrot.lane.b32.xlu0 %v1253, 24
        %v1325 = vpop.permute.xlu0 %1324
        %1326 = vrot.lane.b32.xlu0 %v1254, 24
        %v1327 = vpop.permute.xlu0 %1326
        %1328 = vrot.lane.b32.xlu0 %v1255, 24
        %v1329 = vpop.permute.xlu0 %1328
        %1330 = vrot.lane.b32.xlu0 %v1256, 24
        %v1331 = vpop.permute.xlu0 %1330
        %1332 = vrot.lane.b32.xlu0 %v1257, 24
        %v1333 = vpop.permute.xlu0 %1332
        %1334 = vrot.lane.b32.xlu0 %v1258, 24
        %v1335 = vpop.permute.xlu0 %1334
        %1336 = vrot.lane.b32.xlu0 %v1259, 24
        %v1337 = vpop.permute.xlu0 %1336
        %1338 = vrot.lane.b32.xlu0 %v1260, 24
        %v1339 = vpop.permute.xlu0 %1338
        %1340 = vrot.lane.b32.xlu0 %v1261, 24
        %v1341 = vpop.permute.xlu0 %1340
        %1342 = vrot.lane.b32.xlu0 %v1262, 24
        %v1343 = vpop.permute.xlu0 %1342
        %1344 = vrot.lane.b32.xlu0 %v1263, 24
        %v1345 = vpop.permute.xlu0 %1344
        %1346 = vrot.lane.b32.xlu0 %v1264, 24
        %v1347 = vpop.permute.xlu0 %1346
        %1348 = vrot.lane.b32.xlu0 %v1265, 24
        %v1349 = vpop.permute.xlu0 %1348
        %1350 = vrot.lane.b32.xlu0 %v1266, 24
        %v1351 = vpop.permute.xlu0 %1350
        %1352 = vrot.lane.b32.xlu0 %v1267, 24
        %v1353 = vpop.permute.xlu0 %1352
        %1354 = vrot.lane.b32.xlu0 %v1268, 24
        %v1355 = vpop.permute.xlu0 %1354
        %1356 = vrot.lane.b32.xlu0 %v1269, 24
        %v1357 = vpop.permute.xlu0 %1356
        %1358 = vrot.lane.b32.xlu0 %v1270, 24
        %v1359 = vpop.permute.xlu0 %1358
        %1360 = vrot.lane.b32.xlu0 %v1271, 24
        %v1361 = vpop.permute.xlu0 %1360
        %1362 = vrot.lane.b32.xlu0 %v1272, 24
        %v1363 = vpop.permute.xlu0 %1362
        %1364 = vrot.lane.b32.xlu0 %v1273, 24
        %v1365 = vpop.permute.xlu0 %1364
        %1366 = vrot.lane.b32.xlu0 %v1274, 24
        %v1367 = vpop.permute.xlu0 %1366
        %1368 = vrot.lane.b32.xlu0 %v1275, 24
        %v1369 = vpop.permute.xlu0 %1368
        %1370 = vrot.lane.b32.xlu0 %v1276, 24
        %v1371 = vpop.permute.xlu0 %1370
        %1372 = vrot.lane.b32.xlu0 %v1277, 24
        %v1373 = vpop.permute.xlu0 %1372
        %vm1406 = vcmask 228544
        %1407 = vst.msk [vmem:[#allocation2] sm:$0xff] %vm1406, %v1311
        %1408 = vst.msk [vmem:[#allocation2 + $0x8] sm:$0xff] %vm1406, %v1313
        %1409 = vst.msk [vmem:[#allocation2 + $0x10] sm:$0xff] %vm1406, %v1315
        %1410 = vst.msk [vmem:[#allocation2 + $0x18] sm:$0xff] %vm1406, %v1317
        %1411 = vst.msk [vmem:[#allocation2 + $0x20] sm:$0xff] %vm1406, %v1319
        %1412 = vst.msk [vmem:[#allocation2 + $0x28] sm:$0xff] %vm1406, %v1321
        %1413 = vst.msk [vmem:[#allocation2 + $0x30] sm:$0xff] %vm1406, %v1323
        %1414 = vst.msk [vmem:[#allocation2 + $0x38] sm:$0xff] %vm1406, %v1325
        %1415 = vst.msk [vmem:[#allocation2 + $0x40] sm:$0xff] %vm1406, %v1327
        %1416 = vst.msk [vmem:[#allocation2 + $0x48] sm:$0xff] %vm1406, %v1329
        %1417 = vst.msk [vmem:[#allocation2 + $0x50] sm:$0xff] %vm1406, %v1331
        %1418 = vst.msk [vmem:[#allocation2 + $0x58] sm:$0xff] %vm1406, %v1333
        %1419 = vst.msk [vmem:[#allocation2 + $0x60] sm:$0xff] %vm1406, %v1335
        %1420 = vst.msk [vmem:[#allocation2 + $0x68] sm:$0xff] %vm1406, %v1337
        %1421 = vst.msk [vmem:[#allocation2 + $0x70] sm:$0xff] %vm1406, %v1339
        %1422 = vst.msk [vmem:[#allocation2 + $0x78] sm:$0xff] %vm1406, %v1341
        %1423 = vst.msk [vmem:[#allocation2 + $0x80] sm:$0xff] %vm1406, %v1343
        %1424 = vst.msk [vmem:[#allocation2 + $0x88] sm:$0xff] %vm1406, %v1345
        %1425 = vst.msk [vmem:[#allocation2 + $0x90] sm:$0xff] %vm1406, %v1347
        %1426 = vst.msk [vmem:[#allocation2 + $0x98] sm:$0xff] %vm1406, %v1349
        %1427 = vst.msk [vmem:[#allocation2 + $0xa0] sm:$0xff] %vm1406, %v1351
        %1428 = vst.msk [vmem:[#allocation2 + $0xa8] sm:$0xff] %vm1406, %v1353
        %1429 = vst.msk [vmem:[#allocation2 + $0xb0] sm:$0xff] %vm1406, %v1355
        %1430 = vst.msk [vmem:[#allocation2 + $0xb8] sm:$0xff] %vm1406, %v1357
        %1431 = vst.msk [vmem:[#allocation2 + $0xc0] sm:$0xff] %vm1406, %v1359
        %1432 = vst.msk [vmem:[#allocation2 + $0xc8] sm:$0xff] %vm1406, %v1361
        %1433 = vst.msk [vmem:[#allocation2 + $0xd0] sm:$0xff] %vm1406, %v1363
        %1434 = vst.msk [vmem:[#allocation2 + $0xd8] sm:$0xff] %vm1406, %v1365
        %1435 = vst.msk [vmem:[#allocation2 + $0xe0] sm:$0xff] %vm1406, %v1367
        %1436 = vst.msk [vmem:[#allocation2 + $0xe8] sm:$0xff] %vm1406, %v1369
        %1437 = vst.msk [vmem:[#allocation2 + $0xf0] sm:$0xff] %vm1406, %v1371
        %1438 = vst.msk [vmem:[#allocation2 + $0xf8] sm:$0xff] %vm1406, %v1373
        %v1439 = vld [vmem:[%s1245 + $0x1] sm:$0xff]
        %v1440 = vld [vmem:[%s1245 + $0x9] sm:$0xff]
        %v1441 = vld [vmem:[%s1245 + $0x19] sm:$0xff]
        %v1442 = vld [vmem:[%s1245 + $0x21] sm:$0xff]
        %v1443 = vld [vmem:[%s1245 + $0x31] sm:$0xff]
        %v1444 = vld [vmem:[%s1245 + $0x39] sm:$0xff]
        %v1445 = vld [vmem:[%s1245 + $0x49] sm:$0xff]
        %v1446 = vld [vmem:[%s1245 + $0x51] sm:$0xff]
        %v1447 = vld [vmem:[%s1245 + $0x61] sm:$0xff]
        %v1448 = vld [vmem:[%s1245 + $0x69] sm:$0xff]
        %v1449 = vld [vmem:[%s1245 + $0x79] sm:$0xff]
        %v1450 = vld [vmem:[%s1245 + $0x81] sm:$0xff]
        %v1451 = vld [vmem:[%s1245 + $0x91] sm:$0xff]
        %v1452 = vld [vmem:[%s1245 + $0x99] sm:$0xff]
        %v1453 = vld [vmem:[%s1245 + $0xa9] sm:$0xff]
        %v1454 = vld [vmem:[%s1245 + $0xb1] sm:$0xff]
        %v1455 = vld [vmem:[%s1245 + $0xc1] sm:$0xff]
        %v1456 = vld [vmem:[%s1245 + $0xc9] sm:$0xff]
        %v1457 = vld [vmem:[%s1245 + $0xd9] sm:$0xff]
        %v1458 = vld [vmem:[%s1245 + $0xe1] sm:$0xff]
        %v1459 = vld [vmem:[%s1245 + $0xf1] sm:$0xff]
        %v1460 = vld [vmem:[%s1245 + $0xf9] sm:$0xff]
        %v1461 = vld [vmem:[%s1245 + $0x109] sm:$0xff]
        %v1462 = vld [vmem:[%s1245 + $0x111] sm:$0xff]
        %v1463 = vld [vmem:[%s1245 + $0x121] sm:$0xff]
        %v1464 = vld [vmem:[%s1245 + $0x129] sm:$0xff]
        %v1465 = vld [vmem:[%s1245 + $0x139] sm:$0xff]
        %v1466 = vld [vmem:[%s1245 + $0x141] sm:$0xff]
        %v1467 = vld [vmem:[%s1245 + $0x151] sm:$0xff]
        %v1468 = vld [vmem:[%s1245 + $0x159] sm:$0xff]
        %v1469 = vld [vmem:[%s1245 + $0x169] sm:$0xff]
        %v1470 = vld [vmem:[%s1245 + $0x171] sm:$0xff]
        %1503 = vrot.lane.b32.xlu0 %v1439, 28
        %v1504 = vpop.permute.xlu0 %1503
        %1505 = vrot.lane.b32.xlu0 %v1440, 28
        %v1506 = vpop.permute.xlu0 %1505
        %1507 = vrot.lane.b32.xlu0 %v1441, 28
        %v1508 = vpop.permute.xlu0 %1507
        %1509 = vrot.lane.b32.xlu0 %v1442, 28
        %v1510 = vpop.permute.xlu0 %1509
        %1511 = vrot.lane.b32.xlu0 %v1443, 28
        %v1512 = vpop.permute.xlu0 %1511
        %1513 = vrot.lane.b32.xlu0 %v1444, 28
        %v1514 = vpop.permute.xlu0 %1513
        %1515 = vrot.lane.b32.xlu0 %v1445, 28
        %v1516 = vpop.permute.xlu0 %1515
        %1517 = vrot.lane.b32.xlu0 %v1446, 28
        %v1518 = vpop.permute.xlu0 %1517
        %1519 = vrot.lane.b32.xlu0 %v1447, 28
        %v1520 = vpop.permute.xlu0 %1519
        %1521 = vrot.lane.b32.xlu0 %v1448, 28
        %v1522 = vpop.permute.xlu0 %1521
        %1523 = vrot.lane.b32.xlu0 %v1449, 28
        %v1524 = vpop.permute.xlu0 %1523
        %1525 = vrot.lane.b32.xlu0 %v1450, 28
        %v1526 = vpop.permute.xlu0 %1525
        %1527 = vrot.lane.b32.xlu0 %v1451, 28
        %v1528 = vpop.permute.xlu0 %1527
        %1529 = vrot.lane.b32.xlu0 %v1452, 28
        %v1530 = vpop.permute.xlu0 %1529
        %1531 = vrot.lane.b32.xlu0 %v1453, 28
        %v1532 = vpop.permute.xlu0 %1531
        %1533 = vrot.lane.b32.xlu0 %v1454, 28
        %v1534 = vpop.permute.xlu0 %1533
        %1535 = vrot.lane.b32.xlu0 %v1455, 28
        %v1536 = vpop.permute.xlu0 %1535
        %1537 = vrot.lane.b32.xlu0 %v1456, 28
        %v1538 = vpop.permute.xlu0 %1537
        %1539 = vrot.lane.b32.xlu0 %v1457, 28
        %v1540 = vpop.permute.xlu0 %1539
        %1541 = vrot.lane.b32.xlu0 %v1458, 28
        %v1542 = vpop.permute.xlu0 %1541
        %1543 = vrot.lane.b32.xlu0 %v1459, 28
        %v1544 = vpop.permute.xlu0 %1543
        %1545 = vrot.lane.b32.xlu0 %v1460, 28
        %v1546 = vpop.permute.xlu0 %1545
        %1547 = vrot.lane.b32.xlu0 %v1461, 28
        %v1548 = vpop.permute.xlu0 %1547
        %1549 = vrot.lane.b32.xlu0 %v1462, 28
        %v1550 = vpop.permute.xlu0 %1549
        %1551 = vrot.lane.b32.xlu0 %v1463, 28
        %v1552 = vpop.permute.xlu0 %1551
        %1553 = vrot.lane.b32.xlu0 %v1464, 28
        %v1554 = vpop.permute.xlu0 %1553
        %1555 = vrot.lane.b32.xlu0 %v1465, 28
        %v1556 = vpop.permute.xlu0 %1555
        %1557 = vrot.lane.b32.xlu0 %v1466, 28
        %v1558 = vpop.permute.xlu0 %1557
        %1559 = vrot.lane.b32.xlu0 %v1467, 28
        %v1560 = vpop.permute.xlu0 %1559
        %1561 = vrot.lane.b32.xlu0 %v1468, 28
        %v1562 = vpop.permute.xlu0 %1561
        %1563 = vrot.lane.b32.xlu0 %v1469, 28
        %v1564 = vpop.permute.xlu0 %1563
        %1565 = vrot.lane.b32.xlu0 %v1470, 28
        %v1566 = vpop.permute.xlu0 %1565
        %vm1599 = vcmask 261344
        %1600 = vst.msk [vmem:[#allocation2] sm:$0xff] %vm1599, %v1504
        %1601 = vst.msk [vmem:[#allocation2 + $0x8] sm:$0xff] %vm1599, %v1506
        %1602 = vst.msk [vmem:[#allocation2 + $0x10] sm:$0xff] %vm1599, %v1508
        %1603 = vst.msk [vmem:[#allocation2 + $0x18] sm:$0xff] %vm1599, %v1510
        %1604 = vst.msk [vmem:[#allocation2 + $0x20] sm:$0xff] %vm1599, %v1512
        %1605 = vst.msk [vmem:[#allocation2 + $0x28] sm:$0xff] %vm1599, %v1514
        %1606 = vst.msk [vmem:[#allocation2 + $0x30] sm:$0xff] %vm1599, %v1516
        %1607 = vst.msk [vmem:[#allocation2 + $0x38] sm:$0xff] %vm1599, %v1518
        %1608 = vst.msk [vmem:[#allocation2 + $0x40] sm:$0xff] %vm1599, %v1520
        %1609 = vst.msk [vmem:[#allocation2 + $0x48] sm:$0xff] %vm1599, %v1522
        %1610 = vst.msk [vmem:[#allocation2 + $0x50] sm:$0xff] %vm1599, %v1524
        %1611 = vst.msk [vmem:[#allocation2 + $0x58] sm:$0xff] %vm1599, %v1526
        %1612 = vst.msk [vmem:[#allocation2 + $0x60] sm:$0xff] %vm1599, %v1528
        %1613 = vst.msk [vmem:[#allocation2 + $0x68] sm:$0xff] %vm1599, %v1530
        %1614 = vst.msk [vmem:[#allocation2 + $0x70] sm:$0xff] %vm1599, %v1532
        %1615 = vst.msk [vmem:[#allocation2 + $0x78] sm:$0xff] %vm1599, %v1534
        %1616 = vst.msk [vmem:[#allocation2 + $0x80] sm:$0xff] %vm1599, %v1536
        %1617 = vst.msk [vmem:[#allocation2 + $0x88] sm:$0xff] %vm1599, %v1538
        %1618 = vst.msk [vmem:[#allocation2 + $0x90] sm:$0xff] %vm1599, %v1540
        %1619 = vst.msk [vmem:[#allocation2 + $0x98] sm:$0xff] %vm1599, %v1542
        %1620 = vst.msk [vmem:[#allocation2 + $0xa0] sm:$0xff] %vm1599, %v1544
        %1621 = vst.msk [vmem:[#allocation2 + $0xa8] sm:$0xff] %vm1599, %v1546
        %1622 = vst.msk [vmem:[#allocation2 + $0xb0] sm:$0xff] %vm1599, %v1548
        %1623 = vst.msk [vmem:[#allocation2 + $0xb8] sm:$0xff] %vm1599, %v1550
        %1624 = vst.msk [vmem:[#allocation2 + $0xc0] sm:$0xff] %vm1599, %v1552
        %1625 = vst.msk [vmem:[#allocation2 + $0xc8] sm:$0xff] %vm1599, %v1554
        %1626 = vst.msk [vmem:[#allocation2 + $0xd0] sm:$0xff] %vm1599, %v1556
        %1627 = vst.msk [vmem:[#allocation2 + $0xd8] sm:$0xff] %vm1599, %v1558
        %1628 = vst.msk [vmem:[#allocation2 + $0xe0] sm:$0xff] %vm1599, %v1560
        %1629 = vst.msk [vmem:[#allocation2 + $0xe8] sm:$0xff] %vm1599, %v1562
        %1630 = vst.msk [vmem:[#allocation2 + $0xf0] sm:$0xff] %vm1599, %v1564
        %1631 = vst.msk [vmem:[#allocation2 + $0xf8] sm:$0xff] %vm1599, %v1566
        %v1632 = vld [vmem:[%s1245 + $0x2] sm:$0xff]
        %v1633 = vld [vmem:[%s1245 + $0xa] sm:$0xff]
        %v1634 = vld [vmem:[%s1245 + $0x1a] sm:$0xff]
        %v1635 = vld [vmem:[%s1245 + $0x22] sm:$0xff]
        %v1636 = vld [vmem:[%s1245 + $0x32] sm:$0xff]
        %v1637 = vld [vmem:[%s1245 + $0x3a] sm:$0xff]
        %v1638 = vld [vmem:[%s1245 + $0x4a] sm:$0xff]
        %v1639 = vld [vmem:[%s1245 + $0x52] sm:$0xff]
        %v1640 = vld [vmem:[%s1245 + $0x62] sm:$0xff]
        %v1641 = vld [vmem:[%s1245 + $0x6a] sm:$0xff]
        %v1642 = vld [vmem:[%s1245 + $0x7a] sm:$0xff]
        %v1643 = vld [vmem:[%s1245 + $0x82] sm:$0xff]
        %v1644 = vld [vmem:[%s1245 + $0x92] sm:$0xff]
        %v1645 = vld [vmem:[%s1245 + $0x9a] sm:$0xff]
        %v1646 = vld [vmem:[%s1245 + $0xaa] sm:$0xff]
        %v1647 = vld [vmem:[%s1245 + $0xb2] sm:$0xff]
        %v1648 = vld [vmem:[%s1245 + $0xc2] sm:$0xff]
        %v1649 = vld [vmem:[%s1245 + $0xca] sm:$0xff]
        %v1650 = vld [vmem:[%s1245 + $0xda] sm:$0xff]
        %v1651 = vld [vmem:[%s1245 + $0xe2] sm:$0xff]
        %v1652 = vld [vmem:[%s1245 + $0xf2] sm:$0xff]
        %v1653 = vld [vmem:[%s1245 + $0xfa] sm:$0xff]
        %v1654 = vld [vmem:[%s1245 + $0x10a] sm:$0xff]
        %v1655 = vld [vmem:[%s1245 + $0x112] sm:$0xff]
        %v1656 = vld [vmem:[%s1245 + $0x122] sm:$0xff]
        %v1657 = vld [vmem:[%s1245 + $0x12a] sm:$0xff]
        %v1658 = vld [vmem:[%s1245 + $0x13a] sm:$0xff]
        %v1659 = vld [vmem:[%s1245 + $0x142] sm:$0xff]
        %v1660 = vld [vmem:[%s1245 + $0x152] sm:$0xff]
        %v1661 = vld [vmem:[%s1245 + $0x15a] sm:$0xff]
        %v1662 = vld [vmem:[%s1245 + $0x16a] sm:$0xff]
        %v1663 = vld [vmem:[%s1245 + $0x172] sm:$0xff]
        %1696 = vrot.lane.b32.xlu0 %v1632, 32
        %v1697 = vpop.permute.xlu0 %1696
        %1698 = vrot.lane.b32.xlu0 %v1633, 32
        %v1699 = vpop.permute.xlu0 %1698
        %1700 = vrot.lane.b32.xlu0 %v1634, 32
        %v1701 = vpop.permute.xlu0 %1700
        %1702 = vrot.lane.b32.xlu0 %v1635, 32
        %v1703 = vpop.permute.xlu0 %1702
        %1704 = vrot.lane.b32.xlu0 %v1636, 32
        %v1705 = vpop.permute.xlu0 %1704
        %1706 = vrot.lane.b32.xlu0 %v1637, 32
        %v1707 = vpop.permute.xlu0 %1706
        %1708 = vrot.lane.b32.xlu0 %v1638, 32
        %v1709 = vpop.permute.xlu0 %1708
        %1710 = vrot.lane.b32.xlu0 %v1639, 32
        %v1711 = vpop.permute.xlu0 %1710
        %1712 = vrot.lane.b32.xlu0 %v1640, 32
        %v1713 = vpop.permute.xlu0 %1712
        %1714 = vrot.lane.b32.xlu0 %v1641, 32
        %v1715 = vpop.permute.xlu0 %1714
        %1716 = vrot.lane.b32.xlu0 %v1642, 32
        %v1717 = vpop.permute.xlu0 %1716
        %1718 = vrot.lane.b32.xlu0 %v1643, 32
        %v1719 = vpop.permute.xlu0 %1718
        %1720 = vrot.lane.b32.xlu0 %v1644, 32
        %v1721 = vpop.permute.xlu0 %1720
        %1722 = vrot.lane.b32.xlu0 %v1645, 32
        %v1723 = vpop.permute.xlu0 %1722
        %1724 = vrot.lane.b32.xlu0 %v1646, 32
        %v1725 = vpop.permute.xlu0 %1724
        %1726 = vrot.lane.b32.xlu0 %v1647, 32
        %v1727 = vpop.permute.xlu0 %1726
        %1728 = vrot.lane.b32.xlu0 %v1648, 32
        %v1729 = vpop.permute.xlu0 %1728
        %1730 = vrot.lane.b32.xlu0 %v1649, 32
        %v1731 = vpop.permute.xlu0 %1730
        %1732 = vrot.lane.b32.xlu0 %v1650, 32
        %v1733 = vpop.permute.xlu0 %1732
        %1734 = vrot.lane.b32.xlu0 %v1651, 32
        %v1735 = vpop.permute.xlu0 %1734
        %1736 = vrot.lane.b32.xlu0 %v1652, 32
        %v1737 = vpop.permute.xlu0 %1736
        %1738 = vrot.lane.b32.xlu0 %v1653, 32
        %v1739 = vpop.permute.xlu0 %1738
        %1740 = vrot.lane.b32.xlu0 %v1654, 32
        %v1741 = vpop.permute.xlu0 %1740
        %1742 = vrot.lane.b32.xlu0 %v1655, 32
        %v1743 = vpop.permute.xlu0 %1742
        %1744 = vrot.lane.b32.xlu0 %v1656, 32
        %v1745 = vpop.permute.xlu0 %1744
        %1746 = vrot.lane.b32.xlu0 %v1657, 32
        %v1747 = vpop.permute.xlu0 %1746
        %1748 = vrot.lane.b32.xlu0 %v1658, 32
        %v1749 = vpop.permute.xlu0 %1748
        %1750 = vrot.lane.b32.xlu0 %v1659, 32
        %v1751 = vpop.permute.xlu0 %1750
        %1752 = vrot.lane.b32.xlu0 %v1660, 32
        %v1753 = vpop.permute.xlu0 %1752
        %1754 = vrot.lane.b32.xlu0 %v1661, 32
        %v1755 = vpop.permute.xlu0 %1754
        %1756 = vrot.lane.b32.xlu0 %v1662, 32
        %v1757 = vpop.permute.xlu0 %1756
        %1758 = vrot.lane.b32.xlu0 %v1663, 32
        %v1759 = vpop.permute.xlu0 %1758
        %vm1792 = vcmask 294144
        %1793 = vst.msk [vmem:[#allocation2] sm:$0xff] %vm1792, %v1697
        %1794 = vst.msk [vmem:[#allocation2 + $0x8] sm:$0xff] %vm1792, %v1699
        %1795 = vst.msk [vmem:[#allocation2 + $0x10] sm:$0xff] %vm1792, %v1701
        %1796 = vst.msk [vmem:[#allocation2 + $0x18] sm:$0xff] %vm1792, %v1703
        %1797 = vst.msk [vmem:[#allocation2 + $0x20] sm:$0xff] %vm1792, %v1705
        %1798 = vst.msk [vmem:[#allocation2 + $0x28] sm:$0xff] %vm1792, %v1707
        %1799 = vst.msk [vmem:[#allocation2 + $0x30] sm:$0xff] %vm1792, %v1709
        %1800 = vst.msk [vmem:[#allocation2 + $0x38] sm:$0xff] %vm1792, %v1711
        %1801 = vst.msk [vmem:[#allocation2 + $0x40] sm:$0xff] %vm1792, %v1713
        %1802 = vst.msk [vmem:[#allocation2 + $0x48] sm:$0xff] %vm1792, %v1715
        %1803 = vst.msk [vmem:[#allocation2 + $0x50] sm:$0xff] %vm1792, %v1717
        %1804 = vst.msk [vmem:[#allocation2 + $0x58] sm:$0xff] %vm1792, %v1719
        %1805 = vst.msk [vmem:[#allocation2 + $0x60] sm:$0xff] %vm1792, %v1721
        %1806 = vst.msk [vmem:[#allocation2 + $0x68] sm:$0xff] %vm1792, %v1723
        %1807 = vst.msk [vmem:[#allocation2 + $0x70] sm:$0xff] %vm1792, %v1725
        %1808 = vst.msk [vmem:[#allocation2 + $0x78] sm:$0xff] %vm1792, %v1727
        %1809 = vst.msk [vmem:[#allocation2 + $0x80] sm:$0xff] %vm1792, %v1729
        %1810 = vst.msk [vmem:[#allocation2 + $0x88] sm:$0xff] %vm1792, %v1731
        %1811 = vst.msk [vmem:[#allocation2 + $0x90] sm:$0xff] %vm1792, %v1733
        %1812 = vst.msk [vmem:[#allocation2 + $0x98] sm:$0xff] %vm1792, %v1735
        %1813 = vst.msk [vmem:[#allocation2 + $0xa0] sm:$0xff] %vm1792, %v1737
        %1814 = vst.msk [vmem:[#allocation2 + $0xa8] sm:$0xff] %vm1792, %v1739
        %1815 = vst.msk [vmem:[#allocation2 + $0xb0] sm:$0xff] %vm1792, %v1741
        %1816 = vst.msk [vmem:[#allocation2 + $0xb8] sm:$0xff] %vm1792, %v1743
        %1817 = vst.msk [vmem:[#allocation2 + $0xc0] sm:$0xff] %vm1792, %v1745
        %1818 = vst.msk [vmem:[#allocation2 + $0xc8] sm:$0xff] %vm1792, %v1747
        %1819 = vst.msk [vmem:[#allocation2 + $0xd0] sm:$0xff] %vm1792, %v1749
        %1820 = vst.msk [vmem:[#allocation2 + $0xd8] sm:$0xff] %vm1792, %v1751
        %1821 = vst.msk [vmem:[#allocation2 + $0xe0] sm:$0xff] %vm1792, %v1753
        %1822 = vst.msk [vmem:[#allocation2 + $0xe8] sm:$0xff] %vm1792, %v1755
        %1823 = vst.msk [vmem:[#allocation2 + $0xf0] sm:$0xff] %vm1792, %v1757
        %1824 = vst.msk [vmem:[#allocation2 + $0xf8] sm:$0xff] %vm1792, %v1759
        %v1825 = vld [vmem:[#allocation2] sm:$0xff]
        %v1826 = vld [vmem:[#allocation2 + $0x8] sm:$0xff]
        %v1827 = vld [vmem:[#allocation2 + $0x10] sm:$0xff]
        %v1828 = vld [vmem:[#allocation2 + $0x18] sm:$0xff]
        %v1829 = vld [vmem:[#allocation2 + $0x20] sm:$0xff]
        %v1830 = vld [vmem:[#allocation2 + $0x28] sm:$0xff]
        %v1831 = vld [vmem:[#allocation2 + $0x30] sm:$0xff]
        %v1832 = vld [vmem:[#allocation2 + $0x38] sm:$0xff]
        %v1833 = vld [vmem:[#allocation2 + $0x40] sm:$0xff]
        %v1834 = vld [vmem:[#allocation2 + $0x48] sm:$0xff]
        %v1835 = vld [vmem:[#allocation2 + $0x50] sm:$0xff]
        %v1836 = vld [vmem:[#allocation2 + $0x58] sm:$0xff]
        %v1837 = vld [vmem:[#allocation2 + $0x60] sm:$0xff]
        %v1838 = vld [vmem:[#allocation2 + $0x68] sm:$0xff]
        %v1839 = vld [vmem:[#allocation2 + $0x70] sm:$0xff]
        %v1840 = vld [vmem:[#allocation2 + $0x78] sm:$0xff]
        %v1841 = vld [vmem:[#allocation2 + $0x80] sm:$0xff]
        %v1842 = vld [vmem:[#allocation2 + $0x88] sm:$0xff]
        %v1843 = vld [vmem:[#allocation2 + $0x90] sm:$0xff]
        %v1844 = vld [vmem:[#allocation2 + $0x98] sm:$0xff]
        %v1845 = vld [vmem:[#allocation2 + $0xa0] sm:$0xff]
        %v1846 = vld [vmem:[#allocation2 + $0xa8] sm:$0xff]
        %v1847 = vld [vmem:[#allocation2 + $0xb0] sm:$0xff]
        %v1848 = vld [vmem:[#allocation2 + $0xb8] sm:$0xff]
        %v1849 = vld [vmem:[#allocation2 + $0xc0] sm:$0xff]
        %v1850 = vld [vmem:[#allocation2 + $0xc8] sm:$0xff]
        %v1851 = vld [vmem:[#allocation2 + $0xd0] sm:$0xff]
        %v1852 = vld [vmem:[#allocation2 + $0xd8] sm:$0xff]
        %v1853 = vld [vmem:[#allocation2 + $0xe0] sm:$0xff]
        %v1854 = vld [vmem:[#allocation2 + $0xe8] sm:$0xff]
        %v1855 = vld [vmem:[#allocation2 + $0xf0] sm:$0xff]
        %v1856 = vld [vmem:[#allocation2 + $0xf8] sm:$0xff]
        %v1857 = vpack.c.bf16 %v1826, %v1825
        %v1858 = vpack.c.bf16 %v1828, %v1827
        %v1859 = vpack.c.bf16 %v1830, %v1829
        %v1860 = vpack.c.bf16 %v1832, %v1831
        %v1861 = vpack.c.bf16 %v1834, %v1833
        %v1862 = vpack.c.bf16 %v1836, %v1835
        %v1863 = vpack.c.bf16 %v1838, %v1837
        %v1864 = vpack.c.bf16 %v1840, %v1839
        %v1865 = vpack.c.bf16 %v1842, %v1841
        %v1866 = vpack.c.bf16 %v1844, %v1843
        %v1867 = vpack.c.bf16 %v1846, %v1845
        %v1868 = vpack.c.bf16 %v1848, %v1847
        %v1869 = vpack.c.bf16 %v1850, %v1849
        %v1870 = vpack.c.bf16 %v1852, %v1851
        %v1871 = vpack.c.bf16 %v1854, %v1853
        %v1872 = vpack.c.bf16 %v1856, %v1855
        %v1873 = vld [vmem:[%s1] sm:$0xf]
        %v1874 = vld [vmem:[%s1 + $0x4] sm:$0xf]
        %v1875 = vld [vmem:[%s1 + $0x8] sm:$0xf]
        %v1876 = vld [vmem:[%s1 + $0xc] sm:$0xf]
        %v1877 = vld [vmem:[%s1 + $0x10] sm:$0x3]
        %v1883 = vunpack.c.l.b16 %v1873
        %v1884 = vunpack.c.l.b16 %v1874
        %v1885 = vunpack.c.l.b16 %v1875
        %v1886 = vunpack.c.l.b16 %v1876
        %v1887 = vunpack.c.l.b16 %v1877
        %v1888 = vpack.c.b16 %v1884, %v1883
        %v1889 = vpack.c.b16 %v1886, %v1885
        %v1890 = vpack.c.b16 %v1887, %v1887
        %vm1893 = vcmask 293888
        %v1895 = vsel %vm1893, %v1857, 0
        %v1898 = vsel %vm1893, %v1858, 0
        %v1901 = vsel %vm1893, %v1859, 0
        %v1904 = vsel %vm1893, %v1860, 0
        %v1907 = vsel %vm1893, %v1861, 0
        %v1910 = vsel %vm1893, %v1862, 0
        %v1913 = vsel %vm1893, %v1863, 0
        %v1916 = vsel %vm1893, %v1864, 0
        %v1919 = vsel %vm1893, %v1865, 0
        %v1922 = vsel %vm1893, %v1866, 0
        %v1925 = vsel %vm1893, %v1867, 0
        %v1928 = vsel %vm1893, %v1868, 0
        %v1931 = vsel %vm1893, %v1869, 0
        %v1934 = vsel %vm1893, %v1870, 0
        %v1937 = vsel %vm1893, %v1871, 0
        %v1940 = vsel %vm1893, %v1872, 0
        %vm1942 = vcmask 1041408
        %v1944 = vsel %vm1942, %v1890, 0
        %1946 = vmatpush.bf16.msra.mxu0 0
        %1947 = vmatpush.bf16.msra.mxu0 0
        %1948 = vmatpush.bf16.msra.mxu0 0
        %1949 = vmatpush.bf16.msra.mxu0 0
        %1950 = vmatpush.bf16.msra.mxu0 0
        %1951 = vmatpush.bf16.msra.mxu0 %v1944
        %1952 = vmatpush.bf16.msra.mxu0 %v1889
        %1953 = vmatpush.bf16.msra.mxu0 %v1888
        %1954 = vmatmul.bf16.gmra.mxu0 %v1895
        %v1955 = vpop.f32.mrf.mxu0
        %v1956 = vadd.f32 0.0, %v1955
        %v1957 = vpop.f32.mrf.mxu0
        %v1958 = vadd.f32 0.0, %v1957
        %1959 = vmatmul.bf16.gmra.mxu0 %v1898
        %v1960 = vpop.f32.mrf.mxu0
        %v1961 = vadd.f32 0.0, %v1960
        %v1962 = vpop.f32.mrf.mxu0
        %v1963 = vadd.f32 0.0, %v1962
        %1964 = vmatmul.bf16.gmra.mxu0 %v1901
        %v1965 = vpop.f32.mrf.mxu0
        %v1966 = vadd.f32 0.0, %v1965
        %v1967 = vpop.f32.mrf.mxu0
        %v1968 = vadd.f32 0.0, %v1967
        %1969 = vmatmul.bf16.gmra.mxu0 %v1904
        %v1970 = vpop.f32.mrf.mxu0
        %v1971 = vadd.f32 0.0, %v1970
        %v1972 = vpop.f32.mrf.mxu0
        %v1973 = vadd.f32 0.0, %v1972
        %1974 = vmatmul.bf16.gmra.mxu0 %v1907
        %v1975 = vpop.f32.mrf.mxu0
        %v1976 = vadd.f32 0.0, %v1975
        %v1977 = vpop.f32.mrf.mxu0
        %v1978 = vadd.f32 0.0, %v1977
        %1979 = vmatmul.bf16.gmra.mxu0 %v1910
        %v1980 = vpop.f32.mrf.mxu0
        %v1981 = vadd.f32 0.0, %v1980
        %v1982 = vpop.f32.mrf.mxu0
        %v1983 = vadd.f32 0.0, %v1982
        %1984 = vmatmul.bf16.gmra.mxu0 %v1913
        %v1985 = vpop.f32.mrf.mxu0
        %v1986 = vadd.f32 0.0, %v1985
        %v1987 = vpop.f32.mrf.mxu0
        %v1988 = vadd.f32 0.0, %v1987
        %1989 = vmatmul.bf16.gmra.mxu0 %v1916
        %v1990 = vpop.f32.mrf.mxu0
        %v1991 = vadd.f32 0.0, %v1990
        %v1992 = vpop.f32.mrf.mxu0
        %v1993 = vadd.f32 0.0, %v1992
        %1994 = vmatmul.bf16.gmra.mxu0 %v1919
        %v1995 = vpop.f32.mrf.mxu0
        %v1996 = vadd.f32 0.0, %v1995
        %v1997 = vpop.f32.mrf.mxu0
        %v1998 = vadd.f32 0.0, %v1997
        %1999 = vmatmul.bf16.gmra.mxu0 %v1922
        %v2000 = vpop.f32.mrf.mxu0
        %v2001 = vadd.f32 0.0, %v2000
        %v2002 = vpop.f32.mrf.mxu0
        %v2003 = vadd.f32 0.0, %v2002
        %2004 = vmatmul.bf16.gmra.mxu0 %v1925
        %v2005 = vpop.f32.mrf.mxu0
        %v2006 = vadd.f32 0.0, %v2005
        %v2007 = vpop.f32.mrf.mxu0
        %v2008 = vadd.f32 0.0, %v2007
        %2009 = vmatmul.bf16.gmra.mxu0 %v1928
        %v2010 = vpop.f32.mrf.mxu0
        %v2011 = vadd.f32 0.0, %v2010
        %v2012 = vpop.f32.mrf.mxu0
        %v2013 = vadd.f32 0.0, %v2012
        %2014 = vmatmul.bf16.gmra.mxu0 %v1931
        %v2015 = vpop.f32.mrf.mxu0
        %v2016 = vadd.f32 0.0, %v2015
        %v2017 = vpop.f32.mrf.mxu0
        %v2018 = vadd.f32 0.0, %v2017
        %2019 = vmatmul.bf16.gmra.mxu0 %v1934
        %v2020 = vpop.f32.mrf.mxu0
        %v2021 = vadd.f32 0.0, %v2020
        %v2022 = vpop.f32.mrf.mxu0
        %v2023 = vadd.f32 0.0, %v2022
        %2024 = vmatmul.bf16.gmra.mxu0 %v1937
        %v2025 = vpop.f32.mrf.mxu0
        %v2026 = vadd.f32 0.0, %v2025
        %v2027 = vpop.f32.mrf.mxu0
        %v2028 = vadd.f32 0.0, %v2027
        %2029 = vmatmul.bf16.gmra.mxu0 %v1940
        %v2030 = vpop.f32.mrf.mxu0
        %v2031 = vadd.f32 0.0, %v2030
        %v2032 = vpop.f32.mrf.mxu0
        %v2033 = vadd.f32 0.0, %v2032
        %2034 = vdwg.mxu0
        %v2035 = vadd.f32 %v1956, %v1958
        %v2036 = vadd.f32 %v2035, %v1961
        %v2037 = vadd.f32 %v2036, %v1963
        %v2038 = vadd.f32 %v2037, %v1966
        %v2039 = vadd.f32 %v2038, %v1968
        %v2040 = vadd.f32 %v2039, %v1971
        %v2041 = vadd.f32 %v2040, %v1973
        %v2042 = vadd.f32 %v2041, %v1976
        %v2043 = vadd.f32 %v2042, %v1978
        %v2044 = vadd.f32 %v2043, %v1981
        %v2045 = vadd.f32 %v2044, %v1983
        %v2046 = vadd.f32 %v2045, %v1986
        %v2047 = vadd.f32 %v2046, %v1988
        %v2048 = vadd.f32 %v2047, %v1991
        %v2049 = vadd.f32 %v2048, %v1993
        %v2050 = vadd.f32 %v2049, %v1996
        %v2051 = vadd.f32 %v2050, %v1998
        %v2052 = vadd.f32 %v2051, %v2001
        %v2053 = vadd.f32 %v2052, %v2003
        %v2054 = vadd.f32 %v2053, %v2006
        %v2055 = vadd.f32 %v2054, %v2008
        %v2056 = vadd.f32 %v2055, %v2011
        %v2057 = vadd.f32 %v2056, %v2013
        %v2058 = vadd.f32 %v2057, %v2016
        %v2059 = vadd.f32 %v2058, %v2018
        %v2060 = vadd.f32 %v2059, %v2021
        %v2061 = vadd.f32 %v2060, %v2023
        %v2062 = vadd.f32 %v2061, %v2026
        %v2063 = vadd.f32 %v2062, %v2028
        %v2064 = vadd.f32 %v2063, %v2031
        %v2065 = vadd.f32 %v2064, %v2033
        %v2066 = vrot.slane %v2065, 4
        %v2067 = vadd.f32 %v2065, %v2066
        %v2068 = vrot.slane %v2067, 2
        %v2069 = vadd.f32 %v2067, %v2068
        %v2070 = vrot.slane %v2069, 1
        %v2071 = vadd.f32 %v2069, %v2070
        %2072 = vst [vmem:[%s200] sm:$0x1] %v2071
        %v2073 = vmul.f32 %v1956, %v1956
        %v2074 = vmul.f32 %v1958, %v1958
        %v2075 = vmul.f32 %v1961, %v1961
        %v2076 = vmul.f32 %v1963, %v1963
        %v2077 = vmul.f32 %v1966, %v1966
        %v2078 = vmul.f32 %v1968, %v1968
        %v2079 = vmul.f32 %v1971, %v1971
        %v2080 = vmul.f32 %v1973, %v1973
        %v2081 = vmul.f32 %v1976, %v1976
        %v2082 = vmul.f32 %v1978, %v1978
        %v2083 = vmul.f32 %v1981, %v1981
        %v2084 = vmul.f32 %v1983, %v1983
        %v2085 = vmul.f32 %v1986, %v1986
        %v2086 = vmul.f32 %v1988, %v1988
        %v2087 = vmul.f32 %v1991, %v1991
        %v2088 = vmul.f32 %v1993, %v1993
        %v2089 = vmul.f32 %v1996, %v1996
        %v2090 = vmul.f32 %v1998, %v1998
        %v2091 = vmul.f32 %v2001, %v2001
        %v2092 = vmul.f32 %v2003, %v2003
        %v2093 = vmul.f32 %v2006, %v2006
        %v2094 = vmul.f32 %v2008, %v2008
        %v2095 = vmul.f32 %v2011, %v2011
        %v2096 = vmul.f32 %v2013, %v2013
        %v2097 = vmul.f32 %v2016, %v2016
        %v2098 = vmul.f32 %v2018, %v2018
        %v2099 = vmul.f32 %v2021, %v2021
        %v2100 = vmul.f32 %v2023, %v2023
        %v2101 = vmul.f32 %v2026, %v2026
        %v2102 = vmul.f32 %v2028, %v2028
        %v2103 = vmul.f32 %v2031, %v2031
        %v2104 = vmul.f32 %v2033, %v2033
        %v2105 = vadd.f32 %v2073, %v2074
        %v2106 = vadd.f32 %v2105, %v2075
        %v2107 = vadd.f32 %v2106, %v2076
        %v2108 = vadd.f32 %v2107, %v2077
        %v2109 = vadd.f32 %v2108, %v2078
        %v2110 = vadd.f32 %v2109, %v2079
        %v2111 = vadd.f32 %v2110, %v2080
        %v2112 = vadd.f32 %v2111, %v2081
        %v2113 = vadd.f32 %v2112, %v2082
        %v2114 = vadd.f32 %v2113, %v2083
        %v2115 = vadd.f32 %v2114, %v2084
        %v2116 = vadd.f32 %v2115, %v2085
        %v2117 = vadd.f32 %v2116, %v2086
        %v2118 = vadd.f32 %v2117, %v2087
        %v2119 = vadd.f32 %v2118, %v2088
        %v2120 = vadd.f32 %v2119, %v2089
        %v2121 = vadd.f32 %v2120, %v2090
        %v2122 = vadd.f32 %v2121, %v2091
        %v2123 = vadd.f32 %v2122, %v2092
        %v2124 = vadd.f32 %v2123, %v2093
        %v2125 = vadd.f32 %v2124, %v2094
        %v2126 = vadd.f32 %v2125, %v2095
        %v2127 = vadd.f32 %v2126, %v2096
        %v2128 = vadd.f32 %v2127, %v2097
        %v2129 = vadd.f32 %v2128, %v2098
        %v2130 = vadd.f32 %v2129, %v2099
        %v2131 = vadd.f32 %v2130, %v2100
        %v2132 = vadd.f32 %v2131, %v2101
        %v2133 = vadd.f32 %v2132, %v2102
        %v2134 = vadd.f32 %v2133, %v2103
        %v2135 = vadd.f32 %v2134, %v2104
        %v2136 = vrot.slane %v2135, 4
        %v2137 = vadd.f32 %v2135, %v2136
        %v2138 = vrot.slane %v2137, 2
        %v2139 = vadd.f32 %v2137, %v2138
        %v2140 = vrot.slane %v2139, 1
        %v2141 = vadd.f32 %v2139, %v2140
        %2142 = vst [vmem:[%s206] sm:$0x1] %v2141
        %2143 = vst [vmem:[%s194] sm:$0xff] %v1956
        %2144 = vst [vmem:[%s194 + $0x8] sm:$0xff] %v1958
        %2145 = vst [vmem:[%s194 + $0x10] sm:$0xff] %v1961
        %2146 = vst [vmem:[%s194 + $0x18] sm:$0xff] %v1963
        %2147 = vst [vmem:[%s194 + $0x20] sm:$0xff] %v1966
        %2148 = vst [vmem:[%s194 + $0x28] sm:$0xff] %v1968
        %2149 = vst [vmem:[%s194 + $0x30] sm:$0xff] %v1971
        %2150 = vst [vmem:[%s194 + $0x38] sm:$0xff] %v1973
        %2151 = vst [vmem:[%s194 + $0x40] sm:$0xff] %v1976
        %2152 = vst [vmem:[%s194 + $0x48] sm:$0xff] %v1978
        %2153 = vst [vmem:[%s194 + $0x50] sm:$0xff] %v1981
        %2154 = vst [vmem:[%s194 + $0x58] sm:$0xff] %v1983
        %2155 = vst [vmem:[%s194 + $0x60] sm:$0xff] %v1986
        %2156 = vst [vmem:[%s194 + $0x68] sm:$0xff] %v1988
        %2157 = vst [vmem:[%s194 + $0x70] sm:$0xff] %v1991
        %2158 = vst [vmem:[%s194 + $0x78] sm:$0xff] %v1993
        %2159 = vst [vmem:[%s194 + $0x80] sm:$0xff] %v1996
        %2160 = vst [vmem:[%s194 + $0x88] sm:$0xff] %v1998
        %2161 = vst [vmem:[%s194 + $0x90] sm:$0xff] %v2001
        %2162 = vst [vmem:[%s194 + $0x98] sm:$0xff] %v2003
        %2163 = vst [vmem:[%s194 + $0xa0] sm:$0xff] %v2006
        %2164 = vst [vmem:[%s194 + $0xa8] sm:$0xff] %v2008
        %2165 = vst [vmem:[%s194 + $0xb0] sm:$0xff] %v2011
        %2166 = vst [vmem:[%s194 + $0xb8] sm:$0xff] %v2013
        %2167 = vst [vmem:[%s194 + $0xc0] sm:$0xff] %v2016
        %2168 = vst [vmem:[%s194 + $0xc8] sm:$0xff] %v2018
        %2169 = vst [vmem:[%s194 + $0xd0] sm:$0xff] %v2021
        %2170 = vst [vmem:[%s194 + $0xd8] sm:$0xff] %v2023
        %2171 = vst [vmem:[%s194 + $0xe0] sm:$0xff] %v2026
        %2172 = vst [vmem:[%s194 + $0xe8] sm:$0xff] %v2028
        %2173 = vst [vmem:[%s194 + $0xf0] sm:$0xff] %v2031
        %2174 = vst [vmem:[%s194 + $0xf8] sm:$0xff] %v2033
        %s2175 = sand.u32 %s77, 1
        %s2176 = scalar_lea.sflag [#allocation4], %s2175
        %s2177 = sand.u32 %s77, 1
        %s2178 = smul.addr %s2177, 256
        %s2179 = scalar_lea.vmem [#allocation3], %s2178
        %s2180 = sand.u32 %s22, 1
        %s2181 = scalar_lea.sflag [#allocation6], %s2180
        %s2182 = sand.u32 %s103, 1
        %s2183 = scalar_lea.vmem [#allocation5], %s2182
        %s2184 = sand.u32 %s22, 1
        %s2185 = scalar_lea.sflag [#allocation6], %s2184
        %s2186 = sand.u32 %s129, 1
        %s2187 = scalar_lea.vmem [#allocation7], %s2186
        // Predicated region
        $region29: #{tpu_custom_call.1} parent=27 // pred_check
          %p2188 = pneg %p87
        $region30: #{tpu_custom_call.1} parent=27 // pred_check_branch
          %2190 = sbr.rel (%p2188) target = $region32
        $region31: #{tpu_custom_call.1} parent=27 // pred_region
          %s2191 = smul.u32 32, %s22
          %2193 = vsyncadd %s2176, 0
          %s2194 = smul.addr %s2191, 8
          %s2195 = scalar_lea.hbm %s2, %s2194
          %s2196 = sshll.u32 %s2179, 4
          %s2197 = int_to_ptr.vmem [resolvable:$true] %s2196
          %s2198 = sshll.u32 %s2195, 4
          %s2199 = int_to_ptr.hbm [resolvable:$true] %s2198
          %2204 = dma.vmem_to_hbm [thread:$0]  %s2197, 4096, %s2199, %s2176, 128, 128, 8
        $region32: #{tpu_custom_call.1} parent=27 // pred_fallthru
          _
        // Predicated region
        $region33: #{tpu_custom_call.1} parent=27 // pred_check
          %p2205 = pneg %p113
        $region34: #{tpu_custom_call.1} parent=27 // pred_check_branch
          %2207 = sbr.rel (%p2205) target = $region36
        $region35: #{tpu_custom_call.1} parent=27 // pred_region
          %2209 = vsyncadd %s2181, 0
          %s2210 = scalar_lea.hbm %s3, %s22
          %s2212 = sshll.u32 %s2183, 4
          %s2213 = int_to_ptr.vmem [resolvable:$true] %s2212
          %s2214 = sshll.u32 %s2210, 4
          %s2215 = int_to_ptr.hbm [resolvable:$true] %s2214
          %2217 = dma.vmem_to_hbm [thread:$0]  %s2213, 16, %s2215, %s2181
        $region36: #{tpu_custom_call.1} parent=27 // pred_fallthru
          _
        // Predicated region
        $region37: #{tpu_custom_call.1} parent=27 // pred_check
          %p2218 = pneg %p139
        $region38: #{tpu_custom_call.1} parent=27 // pred_check_branch
          %2220 = sbr.rel (%p2218) target = $region40
        $region39: #{tpu_custom_call.1} parent=27 // pred_region
          %2222 = vsyncadd %s2185, 0
          %s2223 = scalar_lea.hbm %s4, %s22
          %s2225 = sshll.u32 %s2187, 4
          %s2226 = int_to_ptr.vmem [resolvable:$true] %s2225
          %s2227 = sshll.u32 %s2223, 4
          %s2228 = int_to_ptr.hbm [resolvable:$true] %s2227
          %2230 = dma.vmem_to_hbm [thread:$0]  %s2226, 16, %s2228, %s2185
        $region40: #{tpu_custom_call.1} parent=27 // pred_fallthru
          _
      $region28: #{tpu_custom_call.1} parent=5 // pred_fallthru
        _
      %p2231 = scmp.le.s32.totalorder 2, %s17
      // Predicated region
      $region41: #{tpu_custom_call.1} parent=5 // pred_check
        %p2232 = pneg %p2231
      $region42: #{tpu_custom_call.1} parent=5 // pred_check_branch
        %2234 = sbr.rel (%p2232) target = $region44
      $region43: #{tpu_custom_call.1} parent=5 // pred_region
        %s2235 = ssub.s32 %s17, 2
        // Predicated region
        $region45: #{tpu_custom_call.1} parent=43 // pred_check
          %p2236 = pneg %p93
        $region46: #{tpu_custom_call.1} parent=43 // pred_check_branch
          %2238 = sbr.rel (%p2236) target = $region48
        $region47: #{tpu_custom_call.1} parent=43 // pred_region
          %s2239 = sand.u32 %s78, 1
          %s2240 = scalar_lea.sflag [#allocation4], %s2239
          %s2241 = sand.u32 %s78, 1
          %s2242 = smul.addr %s2241, 256
          %s2243 = scalar_lea.vmem [#allocation3], %s2242
          %2245 = dma.done %s2240, 4096
        $region48: #{tpu_custom_call.1} parent=43 // pred_fallthru
          _
        // Predicated region
        $region49: #{tpu_custom_call.1} parent=43 // pred_check
          %p2246 = pneg %p119
        $region50: #{tpu_custom_call.1} parent=43 // pred_check_branch
          %2248 = sbr.rel (%p2246) target = $region52
        $region51: #{tpu_custom_call.1} parent=43 // pred_region
          %s2249 = sand.u32 %s23, 1
          %s2250 = scalar_lea.sflag [#allocation6], %s2249
          %s2251 = sand.u32 %s104, 1
          %s2252 = scalar_lea.vmem [#allocation5], %s2251
          %2254 = dma.done %s2250, 16
        $region52: #{tpu_custom_call.1} parent=43 // pred_fallthru
          _
        // Predicated region
        $region53: #{tpu_custom_call.1} parent=43 // pred_check
          %p2255 = pneg %p145
        $region54: #{tpu_custom_call.1} parent=43 // pred_check_branch
          %2257 = sbr.rel (%p2255) target = $region56
        $region55: #{tpu_custom_call.1} parent=43 // pred_region
          %s2258 = sand.u32 %s23, 1
          %s2259 = scalar_lea.sflag [#allocation6], %s2258
          %s2260 = sand.u32 %s130, 1
          %s2261 = scalar_lea.vmem [#allocation7], %s2260
          %2263 = dma.done %s2259, 16
        $region56: #{tpu_custom_call.1} parent=43 // pred_fallthru
          _
      $region44: #{tpu_custom_call.1} parent=5 // pred_fallthru
        _
    $region6: #{tpu_custom_call.1} parent=1 // loop_footer
      %s21 = sadd.s32 1, %s17
    $region7: #{tpu_custom_call.1} parent=1 // loop_footer_branch
      %16 = sbr.rel target = $region3
    $region8: #{tpu_custom_call.1} parent=1 // loop_exit
      _
    %2264 = vsyncpa [#allocation4], 1
    %s2265 = scalar_lea.sflag [#allocation4], 1
    %2266 = vsyncpa %s2265, 1
    %2267 = vsyncpa [#allocation6], 1
    %s2268 = scalar_lea.sflag [#allocation6], 1
    %2269 = vsyncpa %s2268, 1

</llo_original>
